<compile_context>
chip_gen: v7x
topology: tpu7x:2x2x1
jax: 0.10.0
libtpu: 0.0.40
codegen_flags: <defaults>
</compile_context>

<pallas_src>
import math
import functools

import jax
import jax.numpy as jnp
from jax import lax
from jax.experimental import pallas as pl
from jax.experimental.pallas import tpu as pltpu


# ---------------------------------------------------------------------------
# Fused kernel: one batch element per grid step.
#   inputs : queries (1, Lq, Dq), keys (1, Lk, Dk), values (1, Lk, Dv)
#   weights: W_q (Dq, H), W_k (Dk, H), W_v (Dv, H), W_o (H, H)   [bf16, (in,out)]
#   scalar : valid_lens (B,) int32 in SMEM (scalar prefetch)
#   output : (1, Lq, H) f32
# ---------------------------------------------------------------------------
def _fused_mha_kernel(vl_ref, q_ref, k_ref, v_ref,
                      wq_ref, wk_ref, wv_ref, wo_ref,
                      o_ref, *, num_heads):
    b = pl.program_id(0)
    valid_len = vl_ref[b]                        # scalar from SMEM

    q_in = q_ref[0]                              # (Lq, Dq) f32
    k_in = k_ref[0]                              # (Lk, Dk) f32
    v_in = v_ref[0]                              # (Lk, Dv) f32

    # Input projections: bf16 MXU operands, f32 accumulation.
    q_proj = jnp.dot(q_in.astype(jnp.bfloat16), wq_ref[...],
                     preferred_element_type=jnp.float32)      # (Lq, H)
    k_proj = jnp.dot(k_in.astype(jnp.bfloat16), wk_ref[...],
                     preferred_element_type=jnp.float32)      # (Lk, H)
    v_proj = jnp.dot(v_in.astype(jnp.bfloat16), wv_ref[...],
                     preferred_element_type=jnp.float32)      # (Lk, H)

    Lq, H = q_proj.shape
    Lk = k_proj.shape[0]
    dh = H // num_heads
    scale = 1.0 / math.sqrt(dh)                  # folded into q

    # Key-position mask (same -1e6-then-softmax semantics as the PyTorch ref).
    key_idx = lax.broadcasted_iota(jnp.int32, (Lq, Lk), dimension=1)
    keep = key_idx < valid_len

    # Per-head attention; static unroll over the (small) head count.  Heads
    # are sliced out of the lane axis of the in-VMEM projections, so no HBM
    # transpose / (B*H, L, dh) materialization ever happens.
    head_outs = []
    for h in range(num_heads):
        qh = (q_proj[:, h * dh:(h + 1) * dh] * scale).astype(jnp.bfloat16)
        kh = k_proj[:, h * dh:(h + 1) * dh].astype(jnp.bfloat16)
        vh = v_proj[:, h * dh:(h + 1) * dh].astype(jnp.bfloat16)

        s = jnp.dot(qh, kh.T, preferred_element_type=jnp.float32)  # (Lq, Lk)
        s = jnp.where(keep, s, jnp.float32(-1000000.0))

        m = jnp.max(s, axis=-1, keepdims=True)
        e = jnp.exp(s - m)
        denom = jnp.sum(e, axis=-1, keepdims=True)
        p = e * pl.reciprocal(denom, approx=True)                  # EUP, not VPU divide

        # TODO(synk): nn.Dropout on attention weights is identity in eval /
        # p=0.0, so it is omitted here.
        head_outs.append(
            jnp.dot(p.astype(jnp.bfloat16), vh,
                    preferred_element_type=jnp.float32))           # (Lq, dh)

    # Equivalent of transpose_output: heads concatenated along the feature axis.
    out_concat = jnp.concatenate(head_outs, axis=-1)               # (Lq, H)

    out = jnp.dot(out_concat.astype(jnp.bfloat16), wo_ref[...],
                  preferred_element_type=jnp.float32)              # (Lq, H)
    o_ref[0] = out.astype(o_ref.dtype)


# ---------------------------------------------------------------------------
# Host-side wrappers
# ---------------------------------------------------------------------------
def prepare_params(torch_style_params, dtype=jnp.bfloat16):
    """One-time conversion: PyTorch (out, in) f32 -> MXU-ready (in, out) bf16."""
    return {name: jnp.asarray(w).T.astype(dtype)
            for name, w in torch_style_params.items()}


def multi_head_attention(prepared_params, queries, keys, values, valid_lens,
                         num_heads):
    """Forward pass matching PyTorch MultiHeadAttention (bias=False, eval)."""
    B, Lq, Dq = queries.shape
    _, Lk, Dk = keys.shape
    _, _, Dv = values.shape
    wq = prepared_params["W_q"]          # (Dq, H)
    wk = prepared_params["W_k"]          # (Dk, H)
    wv = prepared_params["W_v"]          # (Dv, H)
    wo = prepared_params["W_o"]          # (H, H)
    H = wq.shape[1]
    assert H % num_heads == 0
    dh = H // num_heads

    if valid_lens is None:
        vl = jnp.full((B,), Lk, dtype=jnp.int32)
    else:
        vl = valid_lens.astype(jnp.int32)

    flops = 2 * B * (Lq * Dq * H + Lk * Dk * H + Lk * Dv * H
                     + 2 * num_heads * Lq * Lk * dh + Lq * H * H)
    transcendentals = B * num_heads * Lq * Lk
    bytes_accessed = (4 * (queries.size + keys.size + values.size + B * Lq * H)
                      + 2 * (wq.size + wk.size + wv.size + wo.size))

    grid_spec = pltpu.PrefetchScalarGridSpec(
        num_scalar_prefetch=1,
        grid=(B,),
        in_specs=[
            pl.BlockSpec((1, Lq, Dq), lambda b, vl_ref: (b, 0, 0)),
            pl.BlockSpec((1, Lk, Dk), lambda b, vl_ref: (b, 0, 0)),
            pl.BlockSpec((1, Lk, Dv), lambda b, vl_ref: (b, 0, 0)),
            pl.BlockSpec((Dq, H), lambda b, vl_ref: (0, 0)),
            pl.BlockSpec((Dk, H), lambda b, vl_ref: (0, 0)),
            pl.BlockSpec((Dv, H), lambda b, vl_ref: (0, 0)),
            pl.BlockSpec((H, H), lambda b, vl_ref: (0, 0)),
        ],
        out_specs=pl.BlockSpec((1, Lq, H), lambda b, vl_ref: (b, 0, 0)),
    )

    return pl.pallas_call(
        functools.partial(_fused_mha_kernel, num_heads=num_heads),
        grid_spec=grid_spec,
        out_shape=jax.ShapeDtypeStruct((B, Lq, H), jnp.float32),
        compiler_params=pltpu.CompilerParams(
            dimension_semantics=("parallel",)),
        cost_estimate=pl.CostEstimate(
            flops=flops,
            transcendentals=transcendentals,
            bytes_accessed=bytes_accessed),
    )(vl, queries, keys, values, wq, wk, wv, wo)


# ---------------------------------------------------------------------------
# Pure-JAX f32 reference (mirrors the PyTorch module) for a sanity check.
# ---------------------------------------------------------------------------
def _reference_mha(torch_style_params, queries, keys, values, valid_lens,
                   num_heads):
    def linear(x, w):                        # w is (out, in) PyTorch convention
        return jnp.einsum("bld,hd->blh", x, w)

    def t_qkv(x):
        B, L, H = x.shape
        x = x.reshape(B, L, num_heads, H // num_heads).transpose(0, 2, 1, 3)
        return x.reshape(B * num_heads, L, H // num_heads)

    q = t_qkv(linear(queries, torch_style_params["W_q"]))
    k = t_qkv(linear(keys, torch_style_params["W_k"]))
    v = t_qkv(linear(values, torch_style_params["W_v"]))
    d = q.shape[-1]
    s = jnp.einsum("bqd,bkd->bqk", q, k) / math.sqrt(d)
    vl = jnp.repeat(valid_lens, num_heads)
    mask = jnp.arange(s.shape[-1])[None, None, :] < vl[:, None, None]
    s = jnp.where(mask, s, -1000000.0)
    p = jax.nn.softmax(s, axis=-1)
    o = jnp.einsum("bqk,bkd->bqd", p, v)
    BH, L, dh = o.shape
    o = o.reshape(BH // num_heads, num_heads, L, dh).transpose(0, 2, 1, 3)
    o = o.reshape(BH // num_heads, L, num_heads * dh)
    return jnp.einsum("blh,oh->blo", o, torch_style_params["W_o"])


if __name__ == "__main__":
    batch, seq_q, seq_k = 2, 8, 8
    key_size = query_size = value_size = 32
    num_hiddens, num_heads = 32, 4

    root = jax.random.PRNGKey(0)
    k1, k2, k3, k4, k5, k6, k7 = jax.random.split(root, 7)

    # Deterministic synthetic parameters (PyTorch Linear convention: (out, in)).
    scale = 1.0 / math.sqrt(num_hiddens)
    torch_style_params = {
        "W_q": jax.random.uniform(k1, (num_hiddens, query_size), jnp.float32, -scale, scale),
        "W_k": jax.random.uniform(k2, (num_hiddens, key_size), jnp.float32, -scale, scale),
        "W_v": jax.random.uniform(k3, (num_hiddens, value_size), jnp.float32, -scale, scale),
        "W_o": jax.random.uniform(k4, (num_hiddens, num_hiddens), jnp.float32, -scale, scale),
    }
    params = prepare_params(torch_style_params)   # transpose + bf16 cast, done once

    queries = jax.random.normal(k5, (batch, seq_q, query_size), jnp.float32)
    keys = jax.random.normal(k6, (batch, seq_k, key_size), jnp.float32)
    values = jax.random.normal(k7, (batch, seq_k, value_size), jnp.float32)
    valid_lens = jnp.array([3, 6], dtype=jnp.int32)

    fwd = jax.jit(functools.partial(multi_head_attention, num_heads=num_heads))
    out = fwd(params, queries, keys, values, valid_lens)
    out = jax.block_until_ready(out)

    assert out.shape == (batch, seq_q, num_hiddens)
    assert bool(jnp.all(jnp.isfinite(out)))

    # Loose tolerance: kernel uses bf16 MXU operands (f32 accumulation),
    # reference is pure f32.
    ref = _reference_mha(torch_style_params, queries, keys, values,
                         valid_lens, num_heads)
    assert bool(jnp.allclose(out, ref, atol=5e-2, rtol=5e-2))

    print("KERNEL_OK")
</pallas_src>

<mosaic_0001>
module attributes {stable_mosaic.version = 11 : i64} {
  func.func @_fused_mha_kernel(%arg0: i32, %arg1: memref<2xi32, #tpu.memory_space<smem>>, %arg2: memref<1x8x32xf32, #tpu.memory_space<vmem>>, %arg3: memref<1x8x32xf32, #tpu.memory_space<vmem>>, %arg4: memref<1x8x32xf32, #tpu.memory_space<vmem>>, %arg5: memref<32x32xbf16, #tpu.memory_space<vmem>>, %arg6: memref<32x32xbf16, #tpu.memory_space<vmem>>, %arg7: memref<32x32xbf16, #tpu.memory_space<vmem>>, %arg8: memref<32x32xbf16, #tpu.memory_space<vmem>>, %arg9: memref<1x8x32xf32, #tpu.memory_space<vmem>>) attributes {dimension_semantics = [#tpu.dimension_semantics<parallel>], iteration_bounds = array<i64: 2>, scalar_prefetch = 1 : i64, scratch_operands = 0 : i64, tpu.core_type = #tpu.core_type<tc>, window_params = [{transform_indices = @transform_0, window_bounds = array<i64: 1, 8, 32>}, {transform_indices = @transform_1, window_bounds = array<i64: 1, 8, 32>}, {transform_indices = @transform_2, window_bounds = array<i64: 1, 8, 32>}, {pipeline_mode = #tpu.pipeline_mode<synchronous>, transform_indices = @transform_3, window_bounds = array<i64: 32, 32>}, {pipeline_mode = #tpu.pipeline_mode<synchronous>, transform_indices = @transform_4, window_bounds = array<i64: 32, 32>}, {pipeline_mode = #tpu.pipeline_mode<synchronous>, transform_indices = @transform_5, window_bounds = array<i64: 32, 32>}, {pipeline_mode = #tpu.pipeline_mode<synchronous>, transform_indices = @transform_6, window_bounds = array<i64: 32, 32>}, {transform_indices = @transform_7, window_bounds = array<i64: 1, 8, 32>}]} {
    %0 = arith.index_cast %arg0 : i32 to index
    %1 = memref.load %arg1[%0] : memref<2xi32, #tpu.memory_space<smem>>
    %c0 = arith.constant 0 : index
    %c0_0 = arith.constant 0 : index
    %c0_1 = arith.constant 0 : index
    %2 = vector.load %arg2[%c0, %c0_0, %c0_1] : memref<1x8x32xf32, #tpu.memory_space<vmem>>, vector<1x8x32xf32>
    %3 = vector.shape_cast %2 : vector<1x8x32xf32> to vector<8x32xf32>
    %c0_2 = arith.constant 0 : index
    %c0_3 = arith.constant 0 : index
    %c0_4 = arith.constant 0 : index
    %4 = vector.load %arg3[%c0_2, %c0_3, %c0_4] : memref<1x8x32xf32, #tpu.memory_space<vmem>>, vector<1x8x32xf32>
    %5 = vector.shape_cast %4 : vector<1x8x32xf32> to vector<8x32xf32>
    %c0_5 = arith.constant 0 : index
    %c0_6 = arith.constant 0 : index
    %c0_7 = arith.constant 0 : index
    %6 = vector.load %arg4[%c0_5, %c0_6, %c0_7] : memref<1x8x32xf32, #tpu.memory_space<vmem>>, vector<1x8x32xf32>
    %7 = vector.shape_cast %6 : vector<1x8x32xf32> to vector<8x32xf32>
    %8 = arith.truncf %3 : vector<8x32xf32> to vector<8x32xbf16>
    %c0_8 = arith.constant 0 : index
    %c0_9 = arith.constant 0 : index
    %9 = vector.load %arg5[%c0_8, %c0_9] : memref<32x32xbf16, #tpu.memory_space<vmem>>, vector<32x32xbf16>
    %cst = arith.constant dense<0.000000e+00> : vector<8x32xf32>
    %10 = tpu.matmul %8, %9, %cst {dimension_numbers = #tpu.dot_dimension_numbers<[1], [0], [0], [1], [0, 0, 1, 1], [], []>} : vector<8x32xbf16>, vector<32x32xbf16>, vector<8x32xf32> -> vector<8x32xf32>
    %11 = arith.truncf %5 : vector<8x32xf32> to vector<8x32xbf16>
    %c0_10 = arith.constant 0 : index
    %c0_11 = arith.constant 0 : index
    %12 = vector.load %arg6[%c0_10, %c0_11] : memref<32x32xbf16, #tpu.memory_space<vmem>>, vector<32x32xbf16>
    %cst_12 = arith.constant dense<0.000000e+00> : vector<8x32xf32>
    %13 = tpu.matmul %11, %12, %cst_12 {dimension_numbers = #tpu.dot_dimension_numbers<[1], [0], [0], [1], [0, 0, 1, 1], [], []>} : vector<8x32xbf16>, vector<32x32xbf16>, vector<8x32xf32> -> vector<8x32xf32>
    %14 = arith.truncf %7 : vector<8x32xf32> to vector<8x32xbf16>
    %c0_13 = arith.constant 0 : index
    %c0_14 = arith.constant 0 : index
    %15 = vector.load %arg7[%c0_13, %c0_14] : memref<32x32xbf16, #tpu.memory_space<vmem>>, vector<32x32xbf16>
    %cst_15 = arith.constant dense<0.000000e+00> : vector<8x32xf32>
    %16 = tpu.matmul %14, %15, %cst_15 {dimension_numbers = #tpu.dot_dimension_numbers<[1], [0], [0], [1], [0, 0, 1, 1], [], []>} : vector<8x32xbf16>, vector<32x32xbf16>, vector<8x32xf32> -> vector<8x32xf32>
    %17 = tpu.iota {dimensions = array<i32: 1>} : vector<8x8xi32>
    %18 = vector.broadcast %1 : i32 to vector<8x8xi32>
    %19 = arith.cmpi slt, %17, %18 : vector<8x8xi32>
    %20 = vector.extract_strided_slice %10 {offsets = [0, 0], sizes = [8, 8], strides = [1, 1]} : vector<8x32xf32> to vector<8x8xf32>
    %cst_16 = arith.constant 0.353553385 : f32
    %21 = vector.broadcast %cst_16 : f32 to vector<8x8xf32>
    %22 = arith.mulf %20, %21 : vector<8x8xf32>
    %23 = arith.truncf %22 : vector<8x8xf32> to vector<8x8xbf16>
    %24 = vector.extract_strided_slice %13 {offsets = [0, 0], sizes = [8, 8], strides = [1, 1]} : vector<8x32xf32> to vector<8x8xf32>
    %25 = arith.truncf %24 : vector<8x8xf32> to vector<8x8xbf16>
    %26 = vector.extract_strided_slice %16 {offsets = [0, 0], sizes = [8, 8], strides = [1, 1]} : vector<8x32xf32> to vector<8x8xf32>
    %27 = arith.truncf %26 : vector<8x8xf32> to vector<8x8xbf16>
    %28 = tpu.transpose %25, [1, 0] : vector<8x8xbf16> -> vector<8x8xbf16>
    %cst_17 = arith.constant dense<0.000000e+00> : vector<8x8xf32>
    %29 = tpu.matmul %23, %28, %cst_17 {dimension_numbers = #tpu.dot_dimension_numbers<[1], [0], [0], [1], [0, 0, 1, 1], [], []>} : vector<8x8xbf16>, vector<8x8xbf16>, vector<8x8xf32> -> vector<8x8xf32>
    %cst_18 = arith.constant -1.000000e+06 : f32
    %30 = vector.broadcast %cst_18 : f32 to vector<8x8xf32>
    %31 = arith.select %19, %29, %30 : vector<8x8xi1>, vector<8x8xf32>
    %cst_19 = arith.constant dense<0xFF800000> : vector<8xf32>
    %32 = vector.multi_reduction <maximumf>, %31, %cst_19 [1] : vector<8x8xf32> to vector<8xf32>
    %33 = vector.shape_cast %32 : vector<8xf32> to vector<8x1xf32>
    %34 = vector.broadcast %33 : vector<8x1xf32> to vector<8x8xf32>
    %35 = arith.subf %31, %34 : vector<8x8xf32>
    %36 = math.exp %35 : vector<8x8xf32>
    %cst_20 = arith.constant dense<0.000000e+00> : vector<8xf32>
    %37 = vector.multi_reduction <add>, %36, %cst_20 [1] : vector<8x8xf32> to vector<8xf32>
    %38 = vector.shape_cast %37 : vector<8xf32> to vector<8x1xf32>
    %39 = tpu.reciprocal %38 {approx = true} : vector<8x1xf32> -> vector<8x1xf32>
    %40 = vector.broadcast %39 : vector<8x1xf32> to vector<8x8xf32>
    %41 = arith.mulf %36, %40 : vector<8x8xf32>
    %42 = arith.truncf %41 : vector<8x8xf32> to vector<8x8xbf16>
    %cst_21 = arith.constant dense<0.000000e+00> : vector<8x8xf32>
    %43 = tpu.matmul %42, %27, %cst_21 {dimension_numbers = #tpu.dot_dimension_numbers<[1], [0], [0], [1], [0, 0, 1, 1], [], []>} : vector<8x8xbf16>, vector<8x8xbf16>, vector<8x8xf32> -> vector<8x8xf32>
    %44 = vector.extract_strided_slice %10 {offsets = [0, 8], sizes = [8, 8], strides = [1, 1]} : vector<8x32xf32> to vector<8x8xf32>
    %cst_22 = arith.constant 0.353553385 : f32
    %45 = vector.broadcast %cst_22 : f32 to vector<8x8xf32>
    %46 = arith.mulf %44, %45 : vector<8x8xf32>
    %47 = arith.truncf %46 : vector<8x8xf32> to vector<8x8xbf16>
    %48 = vector.extract_strided_slice %13 {offsets = [0, 8], sizes = [8, 8], strides = [1, 1]} : vector<8x32xf32> to vector<8x8xf32>
    %49 = arith.truncf %48 : vector<8x8xf32> to vector<8x8xbf16>
    %50 = vector.extract_strided_slice %16 {offsets = [0, 8], sizes = [8, 8], strides = [1, 1]} : vector<8x32xf32> to vector<8x8xf32>
    %51 = arith.truncf %50 : vector<8x8xf32> to vector<8x8xbf16>
    %52 = tpu.transpose %49, [1, 0] : vector<8x8xbf16> -> vector<8x8xbf16>
    %cst_23 = arith.constant dense<0.000000e+00> : vector<8x8xf32>
    %53 = tpu.matmul %47, %52, %cst_23 {dimension_numbers = #tpu.dot_dimension_numbers<[1], [0], [0], [1], [0, 0, 1, 1], [], []>} : vector<8x8xbf16>, vector<8x8xbf16>, vector<8x8xf32> -> vector<8x8xf32>
    %cst_24 = arith.constant -1.000000e+06 : f32
    %54 = vector.broadcast %cst_24 : f32 to vector<8x8xf32>
    %55 = arith.select %19, %53, %54 : vector<8x8xi1>, vector<8x8xf32>
    %cst_25 = arith.constant dense<0xFF800000> : vector<8xf32>
    %56 = vector.multi_reduction <maximumf>, %55, %cst_25 [1] : vector<8x8xf32> to vector<8xf32>
    %57 = vector.shape_cast %56 : vector<8xf32> to vector<8x1xf32>
    %58 = vector.broadcast %57 : vector<8x1xf32> to vector<8x8xf32>
    %59 = arith.subf %55, %58 : vector<8x8xf32>
    %60 = math.exp %59 : vector<8x8xf32>
    %cst_26 = arith.constant dense<0.000000e+00> : vector<8xf32>
    %61 = vector.multi_reduction <add>, %60, %cst_26 [1] : vector<8x8xf32> to vector<8xf32>
    %62 = vector.shape_cast %61 : vector<8xf32> to vector<8x1xf32>
    %63 = tpu.reciprocal %62 {approx = true} : vector<8x1xf32> -> vector<8x1xf32>
    %64 = vector.broadcast %63 : vector<8x1xf32> to vector<8x8xf32>
    %65 = arith.mulf %60, %64 : vector<8x8xf32>
    %66 = arith.truncf %65 : vector<8x8xf32> to vector<8x8xbf16>
    %cst_27 = arith.constant dense<0.000000e+00> : vector<8x8xf32>
    %67 = tpu.matmul %66, %51, %cst_27 {dimension_numbers = #tpu.dot_dimension_numbers<[1], [0], [0], [1], [0, 0, 1, 1], [], []>} : vector<8x8xbf16>, vector<8x8xbf16>, vector<8x8xf32> -> vector<8x8xf32>
    %68 = vector.extract_strided_slice %10 {offsets = [0, 16], sizes = [8, 8], strides = [1, 1]} : vector<8x32xf32> to vector<8x8xf32>
    %cst_28 = arith.constant 0.353553385 : f32
    %69 = vector.broadcast %cst_28 : f32 to vector<8x8xf32>
    %70 = arith.mulf %68, %69 : vector<8x8xf32>
    %71 = arith.truncf %70 : vector<8x8xf32> to vector<8x8xbf16>
    %72 = vector.extract_strided_slice %13 {offsets = [0, 16], sizes = [8, 8], strides = [1, 1]} : vector<8x32xf32> to vector<8x8xf32>
    %73 = arith.truncf %72 : vector<8x8xf32> to vector<8x8xbf16>
    %74 = vector.extract_strided_slice %16 {offsets = [0, 16], sizes = [8, 8], strides = [1, 1]} : vector<8x32xf32> to vector<8x8xf32>
    %75 = arith.truncf %74 : vector<8x8xf32> to vector<8x8xbf16>
    %76 = tpu.transpose %73, [1, 0] : vector<8x8xbf16> -> vector<8x8xbf16>
    %cst_29 = arith.constant dense<0.000000e+00> : vector<8x8xf32>
    %77 = tpu.matmul %71, %76, %cst_29 {dimension_numbers = #tpu.dot_dimension_numbers<[1], [0], [0], [1], [0, 0, 1, 1], [], []>} : vector<8x8xbf16>, vector<8x8xbf16>, vector<8x8xf32> -> vector<8x8xf32>
    %cst_30 = arith.constant -1.000000e+06 : f32
    %78 = vector.broadcast %cst_30 : f32 to vector<8x8xf32>
    %79 = arith.select %19, %77, %78 : vector<8x8xi1>, vector<8x8xf32>
    %cst_31 = arith.constant dense<0xFF800000> : vector<8xf32>
    %80 = vector.multi_reduction <maximumf>, %79, %cst_31 [1] : vector<8x8xf32> to vector<8xf32>
    %81 = vector.shape_cast %80 : vector<8xf32> to vector<8x1xf32>
    %82 = vector.broadcast %81 : vector<8x1xf32> to vector<8x8xf32>
    %83 = arith.subf %79, %82 : vector<8x8xf32>
    %84 = math.exp %83 : vector<8x8xf32>
    %cst_32 = arith.constant dense<0.000000e+00> : vector<8xf32>
    %85 = vector.multi_reduction <add>, %84, %cst_32 [1] : vector<8x8xf32> to vector<8xf32>
    %86 = vector.shape_cast %85 : vector<8xf32> to vector<8x1xf32>
    %87 = tpu.reciprocal %86 {approx = true} : vector<8x1xf32> -> vector<8x1xf32>
    %88 = vector.broadcast %87 : vector<8x1xf32> to vector<8x8xf32>
    %89 = arith.mulf %84, %88 : vector<8x8xf32>
    %90 = arith.truncf %89 : vector<8x8xf32> to vector<8x8xbf16>
    %cst_33 = arith.constant dense<0.000000e+00> : vector<8x8xf32>
    %91 = tpu.matmul %90, %75, %cst_33 {dimension_numbers = #tpu.dot_dimension_numbers<[1], [0], [0], [1], [0, 0, 1, 1], [], []>} : vector<8x8xbf16>, vector<8x8xbf16>, vector<8x8xf32> -> vector<8x8xf32>
    %92 = vector.extract_strided_slice %10 {offsets = [0, 24], sizes = [8, 8], strides = [1, 1]} : vector<8x32xf32> to vector<8x8xf32>
    %cst_34 = arith.constant 0.353553385 : f32
    %93 = vector.broadcast %cst_34 : f32 to vector<8x8xf32>
    %94 = arith.mulf %92, %93 : vector<8x8xf32>
    %95 = arith.truncf %94 : vector<8x8xf32> to vector<8x8xbf16>
    %96 = vector.extract_strided_slice %13 {offsets = [0, 24], sizes = [8, 8], strides = [1, 1]} : vector<8x32xf32> to vector<8x8xf32>
    %97 = arith.truncf %96 : vector<8x8xf32> to vector<8x8xbf16>
    %98 = vector.extract_strided_slice %16 {offsets = [0, 24], sizes = [8, 8], strides = [1, 1]} : vector<8x32xf32> to vector<8x8xf32>
    %99 = arith.truncf %98 : vector<8x8xf32> to vector<8x8xbf16>
    %100 = tpu.transpose %97, [1, 0] : vector<8x8xbf16> -> vector<8x8xbf16>
    %cst_35 = arith.constant dense<0.000000e+00> : vector<8x8xf32>
    %101 = tpu.matmul %95, %100, %cst_35 {dimension_numbers = #tpu.dot_dimension_numbers<[1], [0], [0], [1], [0, 0, 1, 1], [], []>} : vector<8x8xbf16>, vector<8x8xbf16>, vector<8x8xf32> -> vector<8x8xf32>
    %cst_36 = arith.constant -1.000000e+06 : f32
    %102 = vector.broadcast %cst_36 : f32 to vector<8x8xf32>
    %103 = arith.select %19, %101, %102 : vector<8x8xi1>, vector<8x8xf32>
    %cst_37 = arith.constant dense<0xFF800000> : vector<8xf32>
    %104 = vector.multi_reduction <maximumf>, %103, %cst_37 [1] : vector<8x8xf32> to vector<8xf32>
    %105 = vector.shape_cast %104 : vector<8xf32> to vector<8x1xf32>
    %106 = vector.broadcast %105 : vector<8x1xf32> to vector<8x8xf32>
    %107 = arith.subf %103, %106 : vector<8x8xf32>
    %108 = math.exp %107 : vector<8x8xf32>
    %cst_38 = arith.constant dense<0.000000e+00> : vector<8xf32>
    %109 = vector.multi_reduction <add>, %108, %cst_38 [1] : vector<8x8xf32> to vector<8xf32>
    %110 = vector.shape_cast %109 : vector<8xf32> to vector<8x1xf32>
    %111 = tpu.reciprocal %110 {approx = true} : vector<8x1xf32> -> vector<8x1xf32>
    %112 = vector.broadcast %111 : vector<8x1xf32> to vector<8x8xf32>
    %113 = arith.mulf %108, %112 : vector<8x8xf32>
    %114 = arith.truncf %113 : vector<8x8xf32> to vector<8x8xbf16>
    %cst_39 = arith.constant dense<0.000000e+00> : vector<8x8xf32>
    %115 = tpu.matmul %114, %99, %cst_39 {dimension_numbers = #tpu.dot_dimension_numbers<[1], [0], [0], [1], [0, 0, 1, 1], [], []>} : vector<8x8xbf16>, vector<8x8xbf16>, vector<8x8xf32> -> vector<8x8xf32>
    %116 = tpu.concatenate %43, %67, %91, %115 in 1 : vector<8x8xf32>, vector<8x8xf32>, vector<8x8xf32>, vector<8x8xf32> -> vector<8x32xf32>
    %117 = arith.truncf %116 : vector<8x32xf32> to vector<8x32xbf16>
    %c0_40 = arith.constant 0 : index
    %c0_41 = arith.constant 0 : index
    %118 = vector.load %arg8[%c0_40, %c0_41] : memref<32x32xbf16, #tpu.memory_space<vmem>>, vector<32x32xbf16>
    %cst_42 = arith.constant dense<0.000000e+00> : vector<8x32xf32>
    %119 = tpu.matmul %117, %118, %cst_42 {dimension_numbers = #tpu.dot_dimension_numbers<[1], [0], [0], [1], [0, 0, 1, 1], [], []>} : vector<8x32xbf16>, vector<32x32xbf16>, vector<8x32xf32> -> vector<8x32xf32>
    %c0_43 = arith.constant 0 : index
    %c0_44 = arith.constant 0 : index
    %c0_45 = arith.constant 0 : index
    %120 = vector.load %arg9[%c0_43, %c0_44, %c0_45] : memref<1x8x32xf32, #tpu.memory_space<vmem>>, vector<1x8x32xf32>
    %121 = vector.shape_cast %120 : vector<1x8x32xf32> to vector<8x32xf32>
    %122 = vector.shape_cast %119 : vector<8x32xf32> to vector<1x8x32xf32>
    tpu.vector_store %arg9[%c0_43, %c0_44, %c0_45], %122 {strides = array<i32>} : memref<1x8x32xf32, #tpu.memory_space<vmem>>, vector<1x8x32xf32>,
    return
  }
  func.func @transform_0(%arg0: i32, %arg1: memref<2xi32, #tpu.memory_space<smem>>) -> (i32, i32, i32) {
    %c0_i32 = arith.constant 0 : i32
    %c0_i32_0 = arith.constant 0 : i32
    %c0_i32_1 = arith.constant 0 : i32
    return %arg0, %c0_i32, %c0_i32_0 : i32, i32, i32
  }
  func.func @transform_1(%arg0: i32, %arg1: memref<2xi32, #tpu.memory_space<smem>>) -> (i32, i32, i32) {
    %c0_i32 = arith.constant 0 : i32
    %c0_i32_0 = arith.constant 0 : i32
    %c0_i32_1 = arith.constant 0 : i32
    return %arg0, %c0_i32, %c0_i32_0 : i32, i32, i32
  }
  func.func @transform_2(%arg0: i32, %arg1: memref<2xi32, #tpu.memory_space<smem>>) -> (i32, i32, i32) {
    %c0_i32 = arith.constant 0 : i32
    %c0_i32_0 = arith.constant 0 : i32
    %c0_i32_1 = arith.constant 0 : i32
    return %arg0, %c0_i32, %c0_i32_0 : i32, i32, i32
  }
  func.func @transform_3(%arg0: i32, %arg1: memref<2xi32, #tpu.memory_space<smem>>) -> (i32, i32) {
    %c0_i32 = arith.constant 0 : i32
    %c0_i32_0 = arith.constant 0 : i32
    %c0_i32_1 = arith.constant 0 : i32
    return %c0_i32, %c0_i32_0 : i32, i32
  }
  func.func @transform_4(%arg0: i32, %arg1: memref<2xi32, #tpu.memory_space<smem>>) -> (i32, i32) {
    %c0_i32 = arith.constant 0 : i32
    %c0_i32_0 = arith.constant 0 : i32
    %c0_i32_1 = arith.constant 0 : i32
    return %c0_i32, %c0_i32_0 : i32, i32
  }
  func.func @transform_5(%arg0: i32, %arg1: memref<2xi32, #tpu.memory_space<smem>>) -> (i32, i32) {
    %c0_i32 = arith.constant 0 : i32
    %c0_i32_0 = arith.constant 0 : i32
    %c0_i32_1 = arith.constant 0 : i32
    return %c0_i32, %c0_i32_0 : i32, i32
  }
  func.func @transform_6(%arg0: i32, %arg1: memref<2xi32, #tpu.memory_space<smem>>) -> (i32, i32) {
    %c0_i32 = arith.constant 0 : i32
    %c0_i32_0 = arith.constant 0 : i32
    %c0_i32_1 = arith.constant 0 : i32
    return %c0_i32, %c0_i32_0 : i32, i32
  }
  func.func @transform_7(%arg0: i32, %arg1: memref<2xi32, #tpu.memory_space<smem>>) -> (i32, i32, i32) {
    %c0_i32 = arith.constant 0 : i32
    %c0_i32_0 = arith.constant 0 : i32
    %c0_i32_1 = arith.constant 0 : i32
    return %arg0, %c0_i32, %c0_i32_0 : i32, i32, i32
  }
}

</mosaic_0001>

<llo_original>
// kernel: multi_head_attention.1
$region0: #{multi_head_attention.1}
  #allocation0 [shape = 'u32[]', space=smem, size = 0x4, offset = 0x4, fixed_abs, tag = 'smem constant byte address 0x4 - core index']
  #allocation1 [shape = 'u32[144,128]{1,0:T(1,128)}', space=vmem, size = 0x12000, scoped, tag = 'internal scratch']
  #allocation2 [shape = 's32[1]{0}', space=sflag, size = 0x4, scoped, tag = 'scoped memory for multi_head_attention.1']
  #allocation3 [shape = 'u8[512]{0}', space=smem, size = 0x200, scoped, tag = 'prefetched SMEM operand 0']
  %s0 = inlined_call_operand.vmem [shape: s32[2], index: 0, kind: input, shape index: {}]
  %s1 = inlined_call_operand.hbm [shape: f32[2,8,32], index: 1, kind: input, shape index: {}]
  %s2 = inlined_call_operand.vmem [shape: f32[2,8,32], index: 2, kind: input, shape index: {}]
  %s3 = inlined_call_operand.hbm [shape: f32[2,8,32], index: 3, kind: input, shape index: {}]
  %s4 = inlined_call_operand.hbm [shape: bf16[32,32], index: 4, kind: input, shape index: {}]
  %s5 = inlined_call_operand.hbm [shape: bf16[32,32], index: 5, kind: input, shape index: {}]
  %s6 = inlined_call_operand.hbm [shape: bf16[32,32], index: 6, kind: input, shape index: {}]
  %s7 = inlined_call_operand.hbm [shape: bf16[32,32], index: 7, kind: input, shape index: {}]
  %s8 = inlined_call_operand.hbm [shape: f32[2,8,32], index: 8, kind: output, shape index: {}]
  %s9 = sld [smem:[#allocation0]]
  $region85: #{multi_head_attention.1} parent=0
    _
  %s11 = ssub.s32 1, %s9
  %s12 = scalar_select 0, %s11, %s9
  %s13 = sshll.u32 %s0, 4
  %s14 = int_to_ptr.vmem [resolvable:$true] %s13
  %16 = dma.vmem_to_smem %s14, 16, [#allocation3], [#allocation2]
  %17 = dma.done [#allocation2], 16
  %18 = sfence
  $region1: #{multi_head_attention.1} parent=0
    #allocation4 [shape = 'u8[8192]{0}', space=vmem, size = 0x2000, scoped, tag = 'input window, operand 1']
    #allocation5 [shape = 's32[2]{0}', space=sflag, size = 0x8, scoped, tag = 'scoped memory for multi_head_attention.1']
    #allocation6 [shape = 's32[2]{0}', space=sflag, size = 0x8, scoped, tag = 'scoped memory for multi_head_attention.1']
    #allocation7 [shape = 'u8[8192]{0}', space=vmem, size = 0x2000, scoped, tag = 'input window, operand 3']
    #allocation8 [shape = 's32[2]{0}', space=sflag, size = 0x8, scoped, tag = 'scoped memory for multi_head_attention.1']
    #allocation9 [shape = 'u8[8192]{0}', space=vmem, size = 0x2000, scoped, tag = 'input window, operand 4, single buffered']
    #allocation10 [shape = 'u8[8192]{0}', space=vmem, size = 0x2000, scoped, tag = 'input window, operand 5, single buffered']
    #allocation11 [shape = 's32[1]{0}', space=sflag, size = 0x4, scoped, tag = 'scoped memory for multi_head_attention.1']
    #allocation12 [shape = 'u8[8192]{0}', space=vmem, size = 0x2000, scoped, tag = 'input window, operand 6, single buffered']
    #allocation13 [shape = 'u8[8192]{0}', space=vmem, size = 0x2000, scoped, tag = 'input window, operand 7, single buffered']
    #allocation14 [shape = 's32[1]{0}', space=sflag, size = 0x4, scoped, tag = 'scoped memory for multi_head_attention.1']
    #allocation15 [shape = 'u8[8192]{0}', space=vmem, size = 0x2000, scoped, tag = 'output window, operand 0']
    %19 = vsyncpa [#allocation5], 0
    %s20 = scalar_lea.sflag [#allocation5], 1
    %21 = vsyncpa %s20, 0
    %22 = vsyncpa [#allocation8], 0
    %s23 = scalar_lea.sflag [#allocation8], 1
    %24 = vsyncpa %s23, 0
    %25 = vsyncpa [#allocation11], 0
    %26 = vsyncpa [#allocation14], 0
    %27 = vsyncpa [#allocation6], 0
    %s28 = scalar_lea.sflag [#allocation6], 1
    %29 = vsyncpa %s28, 0
    loop: start=0, step=1, limit=4
    $region2: #{multi_head_attention.1} parent=1 // loop_pre_header
      _
    $region3: #{multi_head_attention.1} parent=1 // loop_header
      %s31 = sphi 0, %s35
      %p32 = scmp.ge.s32.totalorder %s31, 4
      %s41 = sphi 0, %s43
      %s44 = sphi 0, %s41
      %s45 = sphi 0, %s44
      %s61 = sphi 0, %s45
      %s67 = sphi 0, %s69
      %s70 = sphi 0, %s67
      %s71 = sphi 0, %s70
      %s87 = sphi 0, %s71
      %s93 = sphi 0, %s95
      %s96 = sphi 0, %s93
      %s97 = sphi 0, %s96
      %s113 = sphi 0, %s97
      %s117 = sphi 0, %s117
      %s119 = sphi 0, %s117
      %s120 = sphi 0, %s119
      %s134 = sphi 0, %s120
      %s138 = sphi 0, %s138
      %s140 = sphi 0, %s138
      %s141 = sphi 0, %s140
      %s155 = sphi 0, %s141
      %s159 = sphi 0, %s159
      %s161 = sphi 0, %s159
      %s162 = sphi 0, %s161
      %s176 = sphi 0, %s162
      %s180 = sphi 0, %s180
      %s182 = sphi 0, %s180
      %s183 = sphi 0, %s182
      %s197 = sphi 0, %s183
      %s203 = sphi 0, %s205
      %s206 = sphi 0, %s203
      %s207 = sphi 0, %s206
      %s223 = sphi 0, %s207
    $region4: #{multi_head_attention.1} parent=1 // loop_header_branch
      %34 = sbr.rel (%p32) target = $region8
    $region5: #{multi_head_attention.1} parent=1 // loop_body
      %s36 = ssub.s32 %s31, 1
      %s37 = ssub.s32 %s31, 2
      %s38 = sadd.s32 %s31, 1
      %s39 = ssub.s32 %s31, %s38
      %p40 = scmp.eq.s32.totalorder %s39, 0
      %s42 = sadd.s32 %s41, 1
      %s43 = scalar_select %p40, %s41, %s42
      %p46 = pneg %p40
      %p47 = scmp.eq.s32.totalorder %s31, 1
      %p48 = por %p46, %p47
      %p49 = scmp.ne.s32.totalorder %s41, %s44
      %p50 = scmp.eq.s32.totalorder %s31, 0
      %p51 = por %p49, %p50
      %p52 = scmp.ne.s32.totalorder %s41, %s44
      %p53 = scmp.eq.s32.totalorder %s36, 1
      %p54 = por %p52, %p53
      %p55 = scmp.ne.s32.totalorder %s44, %s45
      %p56 = scmp.eq.s32.totalorder %s36, 0
      %p57 = por %p55, %p56
      %p58 = scmp.ne.s32.totalorder %s44, %s45
      %p59 = scmp.eq.s32.totalorder %s37, 1
      %p60 = por %p58, %p59
      %p62 = scmp.ne.s32.totalorder %s45, %s61
      %p63 = scmp.eq.s32.totalorder %s37, 0
      %p64 = por %p62, %p63
      %s65 = ssub.s32 %s31, %s38
      %p66 = scmp.eq.s32.totalorder %s65, 0
      %s68 = sadd.s32 %s67, 1
      %s69 = scalar_select %p66, %s67, %s68
      %p72 = pneg %p66
      %p73 = scmp.eq.s32.totalorder %s31, 1
      %p74 = por %p72, %p73
      %p75 = scmp.ne.s32.totalorder %s67, %s70
      %p76 = scmp.eq.s32.totalorder %s31, 0
      %p77 = por %p75, %p76
      %p78 = scmp.ne.s32.totalorder %s67, %s70
      %p79 = scmp.eq.s32.totalorder %s36, 1
      %p80 = por %p78, %p79
      %p81 = scmp.ne.s32.totalorder %s70, %s71
      %p82 = scmp.eq.s32.totalorder %s36, 0
      %p83 = por %p81, %p82
      %p84 = scmp.ne.s32.totalorder %s70, %s71
      %p85 = scmp.eq.s32.totalorder %s37, 1
      %p86 = por %p84, %p85
      %p88 = scmp.ne.s32.totalorder %s71, %s87
      %p89 = scmp.eq.s32.totalorder %s37, 0
      %p90 = por %p88, %p89
      %s91 = ssub.s32 %s31, %s38
      %p92 = scmp.eq.s32.totalorder %s91, 0
      %s94 = sadd.s32 %s93, 1
      %s95 = scalar_select %p92, %s93, %s94
      %p98 = pneg %p92
      %p99 = scmp.eq.s32.totalorder %s31, 1
      %p100 = por %p98, %p99
      %p101 = scmp.ne.s32.totalorder %s93, %s96
      %p102 = scmp.eq.s32.totalorder %s31, 0
      %p103 = por %p101, %p102
      %p104 = scmp.ne.s32.totalorder %s93, %s96
      %p105 = scmp.eq.s32.totalorder %s36, 1
      %p106 = por %p104, %p105
      %p107 = scmp.ne.s32.totalorder %s96, %s97
      %p108 = scmp.eq.s32.totalorder %s36, 0
      %p109 = por %p107, %p108
      %p110 = scmp.ne.s32.totalorder %s96, %s97
      %p111 = scmp.eq.s32.totalorder %s37, 1
      %p112 = por %p110, %p111
      %p114 = scmp.ne.s32.totalorder %s97, %s113
      %p115 = scmp.eq.s32.totalorder %s37, 0
      %p116 = por %p114, %p115
      %s118 = sadd.s32 %s117, 1
      %p121 = scmp.eq.s32.totalorder %s31, 1
      %p122 = scmp.ne.s32.totalorder %s117, %s119
      %p123 = scmp.eq.s32.totalorder %s31, 0
      %p124 = por %p122, %p123
      %p125 = scmp.ne.s32.totalorder %s117, %s119
      %p126 = scmp.eq.s32.totalorder %s36, 1
      %p127 = por %p125, %p126
      %p128 = scmp.ne.s32.totalorder %s119, %s120
      %p129 = scmp.eq.s32.totalorder %s36, 0
      %p130 = por %p128, %p129
      %p131 = scmp.ne.s32.totalorder %s119, %s120
      %p132 = scmp.eq.s32.totalorder %s37, 1
      %p133 = por %p131, %p132
      %p135 = scmp.ne.s32.totalorder %s120, %s134
      %p136 = scmp.eq.s32.totalorder %s37, 0
      %p137 = por %p135, %p136
      %s139 = sadd.s32 %s138, 1
      %p142 = scmp.eq.s32.totalorder %s31, 1
      %p143 = scmp.ne.s32.totalorder %s138, %s140
      %p144 = scmp.eq.s32.totalorder %s31, 0
      %p145 = por %p143, %p144
      %p146 = scmp.ne.s32.totalorder %s138, %s140
      %p147 = scmp.eq.s32.totalorder %s36, 1
      %p148 = por %p146, %p147
      %p149 = scmp.ne.s32.totalorder %s140, %s141
      %p150 = scmp.eq.s32.totalorder %s36, 0
      %p151 = por %p149, %p150
      %p152 = scmp.ne.s32.totalorder %s140, %s141
      %p153 = scmp.eq.s32.totalorder %s37, 1
      %p154 = por %p152, %p153
      %p156 = scmp.ne.s32.totalorder %s141, %s155
      %p157 = scmp.eq.s32.totalorder %s37, 0
      %p158 = por %p156, %p157
      %s160 = sadd.s32 %s159, 1
      %p163 = scmp.eq.s32.totalorder %s31, 1
      %p164 = scmp.ne.s32.totalorder %s159, %s161
      %p165 = scmp.eq.s32.totalorder %s31, 0
      %p166 = por %p164, %p165
      %p167 = scmp.ne.s32.totalorder %s159, %s161
      %p168 = scmp.eq.s32.totalorder %s36, 1
      %p169 = por %p167, %p168
      %p170 = scmp.ne.s32.totalorder %s161, %s162
      %p171 = scmp.eq.s32.totalorder %s36, 0
      %p172 = por %p170, %p171
      %p173 = scmp.ne.s32.totalorder %s161, %s162
      %p174 = scmp.eq.s32.totalorder %s37, 1
      %p175 = por %p173, %p174
      %p177 = scmp.ne.s32.totalorder %s162, %s176
      %p178 = scmp.eq.s32.totalorder %s37, 0
      %p179 = por %p177, %p178
      %s181 = sadd.s32 %s180, 1
      %p184 = scmp.eq.s32.totalorder %s31, 1
      %p185 = scmp.ne.s32.totalorder %s180, %s182
      %p186 = scmp.eq.s32.totalorder %s31, 0
      %p187 = por %p185, %p186
      %p188 = scmp.ne.s32.totalorder %s180, %s182
      %p189 = scmp.eq.s32.totalorder %s36, 1
      %p190 = por %p188, %p189
      %p191 = scmp.ne.s32.totalorder %s182, %s183
      %p192 = scmp.eq.s32.totalorder %s36, 0
      %p193 = por %p191, %p192
      %p194 = scmp.ne.s32.totalorder %s182, %s183
      %p195 = scmp.eq.s32.totalorder %s37, 1
      %p196 = por %p194, %p195
      %p198 = scmp.ne.s32.totalorder %s183, %s197
      %p199 = scmp.eq.s32.totalorder %s37, 0
      %p200 = por %p198, %p199
      %s201 = ssub.s32 %s31, %s38
      %p202 = scmp.eq.s32.totalorder %s201, 0
      %s204 = sadd.s32 %s203, 1
      %s205 = scalar_select %p202, %s203, %s204
      %p208 = pneg %p202
      %p209 = scmp.eq.s32.totalorder %s31, 1
      %p210 = por %p208, %p209
      %p211 = scmp.ne.s32.totalorder %s203, %s206
      %p212 = scmp.eq.s32.totalorder %s31, 0
      %p213 = por %p211, %p212
      %p214 = scmp.ne.s32.totalorder %s203, %s206
      %p215 = scmp.eq.s32.totalorder %s36, 1
      %p216 = por %p214, %p215
      %p217 = scmp.ne.s32.totalorder %s206, %s207
      %p218 = scmp.eq.s32.totalorder %s36, 0
      %p219 = por %p217, %p218
      %p220 = scmp.ne.s32.totalorder %s206, %s207
      %p221 = scmp.eq.s32.totalorder %s37, 1
      %p222 = por %p220, %p221
      %p224 = scmp.ne.s32.totalorder %s207, %s223
      %p225 = scmp.eq.s32.totalorder %s37, 0
      %p226 = por %p224, %p225
      %p227 = scmp.le.s32.totalorder 1, %s31
      %p228 = scmp.lt.s32.totalorder %s31, 3
      %p229 = pnand %p227, %p228
      %p230 = pneg %p229
      // Predicated region
      $region9: #{multi_head_attention.1} parent=5 // pred_check
        _
      $region10: #{multi_head_attention.1} parent=5 // pred_check_branch
        %232 = sbr.rel (%p229) target = $region12
      $region11: #{multi_head_attention.1} parent=5 // pred_region
        %s233 = ssub.s32 %s31, 1
        // Predicated region
        $region13: #{multi_head_attention.1} parent=11 // pred_check
          %p234 = pneg %p130
        $region14: #{multi_head_attention.1} parent=11 // pred_check_branch
          %236 = sbr.rel (%p234) target = $region16
        $region15: #{multi_head_attention.1} parent=11 // pred_region
          %s238 = ssub.s32 256, 256
          %239 = vsyncadd [#allocation8], %s238
          %s240 = sshll.u32 [#allocation9], 4
          %s241 = int_to_ptr.vmem [resolvable:$true] %s240
          %246 = dma.hbm_to_vmem [thread:$0]  %s4, 256, %s241, [#allocation8], 64, 64, 4
        $region16: #{multi_head_attention.1} parent=11 // pred_fallthru
          _
        // Predicated region
        $region17: #{multi_head_attention.1} parent=11 // pred_check
          %p247 = pneg %p151
        $region18: #{multi_head_attention.1} parent=11 // pred_check_branch
          %249 = sbr.rel (%p247) target = $region20
        $region19: #{multi_head_attention.1} parent=11 // pred_region
          %s251 = ssub.s32 256, 256
          %252 = vsyncadd [#allocation11], %s251
          %s253 = sshll.u32 [#allocation10], 4
          %s254 = int_to_ptr.vmem [resolvable:$true] %s253
          %259 = dma.hbm_to_vmem [thread:$0]  %s5, 256, %s254, [#allocation11], 64, 64, 4
        $region20: #{multi_head_attention.1} parent=11 // pred_fallthru
          _
        // Predicated region
        $region21: #{multi_head_attention.1} parent=11 // pred_check
          %p260 = pneg %p172
        $region22: #{multi_head_attention.1} parent=11 // pred_check_branch
          %262 = sbr.rel (%p260) target = $region24
        $region23: #{multi_head_attention.1} parent=11 // pred_region
          %s264 = ssub.s32 256, 256
          %265 = vsyncadd [#allocation11], %s264
          %s266 = sshll.u32 [#allocation12], 4
          %s267 = int_to_ptr.vmem [resolvable:$true] %s266
          %272 = dma.hbm_to_vmem [thread:$0]  %s6, 256, %s267, [#allocation11], 64, 64, 4
        $region24: #{multi_head_attention.1} parent=11 // pred_fallthru
          _
        // Predicated region
        $region25: #{multi_head_attention.1} parent=11 // pred_check
          %p273 = pneg %p193
        $region26: #{multi_head_attention.1} parent=11 // pred_check_branch
          %275 = sbr.rel (%p273) target = $region28
        $region27: #{multi_head_attention.1} parent=11 // pred_region
          %s277 = ssub.s32 256, 256
          %278 = vsyncadd [#allocation14], %s277
          %s279 = sshll.u32 [#allocation13], 4
          %s280 = int_to_ptr.vmem [resolvable:$true] %s279
          %285 = dma.hbm_to_vmem [thread:$0]  %s7, 256, %s280, [#allocation14], 64, 64, 4
        $region28: #{multi_head_attention.1} parent=11 // pred_fallthru
          _
      $region12: #{multi_head_attention.1} parent=5 // pred_fallthru
        _
      %p286 = scmp.lt.s32.totalorder %s31, 2
      // Predicated region
      $region29: #{multi_head_attention.1} parent=5 // pred_check
        %p287 = pneg %p286
      $region30: #{multi_head_attention.1} parent=5 // pred_check_branch
        %289 = sbr.rel (%p287) target = $region32
      $region31: #{multi_head_attention.1} parent=5 // pred_region
        // Predicated region
        $region33: #{multi_head_attention.1} parent=31 // pred_check
          %p290 = pneg %p51
        $region34: #{multi_head_attention.1} parent=31 // pred_check_branch
          %292 = sbr.rel (%p290) target = $region36
        $region35: #{multi_head_attention.1} parent=31 // pred_region
          %s293 = sand.u32 %s41, 1
          %s294 = scalar_lea.sflag [#allocation5], %s293
          %s295 = sand.u32 %s41, 1
          %s296 = smul.addr %s295, 8
          %s297 = scalar_lea.vmem [#allocation4], %s296
          %s299 = ssub.s32 128, 128
          %300 = vsyncadd %s294, %s299
          %s301 = smul.addr %s31, 128
          %s302 = scalar_lea.hbm %s1, %s301
          %s304 = sshll.u32 %s297, 4
          %s305 = int_to_ptr.vmem [resolvable:$true] %s304
          %307 = dma.hbm_to_vmem [thread:$0]  %s302, 128, %s305, %s294
        $region36: #{multi_head_attention.1} parent=31 // pred_fallthru
          _
        // Predicated region
        $region37: #{multi_head_attention.1} parent=31 // pred_check
          %p308 = pneg %p77
        $region38: #{multi_head_attention.1} parent=31 // pred_check_branch
          %310 = sbr.rel (%p308) target = $region40
        $region39: #{multi_head_attention.1} parent=31 // pred_region
          %p311 = scmp.lt.s32.totalorder %s31, 1
          %s312 = scalar_select %p311, %s31, 1
          %s313 = smul.addr %s312, 8
          %s314 = scalar_lea.vmem %s2, %s313
        $region40: #{multi_head_attention.1} parent=31 // pred_fallthru
          _
        // Predicated region
        $region41: #{multi_head_attention.1} parent=31 // pred_check
          %p315 = pneg %p103
        $region42: #{multi_head_attention.1} parent=31 // pred_check_branch
          %317 = sbr.rel (%p315) target = $region44
        $region43: #{multi_head_attention.1} parent=31 // pred_region
          %s318 = sand.u32 %s31, 1
          %s319 = scalar_lea.sflag [#allocation8], %s318
          %s320 = sand.u32 %s93, 1
          %s321 = smul.addr %s320, 8
          %s322 = scalar_lea.vmem [#allocation7], %s321
          %s324 = ssub.s32 128, 128
          %325 = vsyncadd %s319, %s324
          %s326 = smul.addr %s31, 128
          %s327 = scalar_lea.hbm %s3, %s326
          %s329 = sshll.u32 %s322, 4
          %s330 = int_to_ptr.vmem [resolvable:$true] %s329
          %332 = dma.hbm_to_vmem [thread:$0]  %s327, 128, %s330, %s319
        $region44: #{multi_head_attention.1} parent=31 // pred_fallthru
          _
      $region32: #{multi_head_attention.1} parent=5 // pred_fallthru
        _
      %p333 = scmp.le.s32.totalorder 1, %s31
      %p334 = scmp.lt.s32.totalorder %s31, 3
      %p335 = pnand %p333, %p334
      %p336 = pneg %p335
      // Predicated region
      $region45: #{multi_head_attention.1} parent=5 // pred_check
        _
      $region46: #{multi_head_attention.1} parent=5 // pred_check_branch
        %338 = sbr.rel (%p335) target = $region48
      $region47: #{multi_head_attention.1} parent=5 // pred_region
        %s339 = ssub.s32 %s31, 1
        %s340 = sand.u32 %s44, 1
        %s341 = scalar_lea.sflag [#allocation5], %s340
        %s342 = sand.u32 %s44, 1
        %s343 = smul.addr %s342, 8
        %s344 = scalar_lea.vmem [#allocation4], %s343
        // Predicated region
        $region49: #{multi_head_attention.1} parent=47 // pred_check
          %p345 = pneg %p57
        $region50: #{multi_head_attention.1} parent=47 // pred_check_branch
          %347 = sbr.rel (%p345) target = $region52
        $region51: #{multi_head_attention.1} parent=47 // pred_region
          %348 = dma.done %s341, 128
        $region52: #{multi_head_attention.1} parent=47 // pred_fallthru
          _
        %s349 = sand.u32 %s36, 1
        %s350 = scalar_lea.sflag [#allocation8], %s349
        %s351 = sand.u32 %s96, 1
        %s352 = smul.addr %s351, 8
        %s353 = scalar_lea.vmem [#allocation7], %s352
        // Predicated region
        $region53: #{multi_head_attention.1} parent=47 // pred_check
          %p354 = pneg %p109
        $region54: #{multi_head_attention.1} parent=47 // pred_check_branch
          %356 = sbr.rel (%p354) target = $region56
        $region55: #{multi_head_attention.1} parent=47 // pred_region
          %357 = dma.done %s350, 128
        $region56: #{multi_head_attention.1} parent=47 // pred_fallthru
          _
        // Predicated region
        $region57: #{multi_head_attention.1} parent=47 // pred_check
          %p358 = pneg %p130
        $region58: #{multi_head_attention.1} parent=47 // pred_check_branch
          %360 = sbr.rel (%p358) target = $region60
        $region59: #{multi_head_attention.1} parent=47 // pred_region
          %361 = dma.done [#allocation8], 256
        $region60: #{multi_head_attention.1} parent=47 // pred_fallthru
          _
        // Predicated region
        $region61: #{multi_head_attention.1} parent=47 // pred_check
          %p362 = pneg %p151
        $region62: #{multi_head_attention.1} parent=47 // pred_check_branch
          %364 = sbr.rel (%p362) target = $region64
        $region63: #{multi_head_attention.1} parent=47 // pred_region
          %365 = dma.done [#allocation11], 256
        $region64: #{multi_head_attention.1} parent=47 // pred_fallthru
          _
        // Predicated region
        $region65: #{multi_head_attention.1} parent=47 // pred_check
          %p366 = pneg %p172
        $region66: #{multi_head_attention.1} parent=47 // pred_check_branch
          %368 = sbr.rel (%p366) target = $region68
        $region67: #{multi_head_attention.1} parent=47 // pred_region
          %369 = dma.done [#allocation11], 256
        $region68: #{multi_head_attention.1} parent=47 // pred_fallthru
          _
        // Predicated region
        $region69: #{multi_head_attention.1} parent=47 // pred_check
          %p370 = pneg %p193
        $region70: #{multi_head_attention.1} parent=47 // pred_check_branch
          %372 = sbr.rel (%p370) target = $region72
        $region71: #{multi_head_attention.1} parent=47 // pred_region
          %373 = dma.done [#allocation14], 256
        $region72: #{multi_head_attention.1} parent=47 // pred_fallthru
          _
        %s374 = sand.u32 %s44, 1
        %s375 = scalar_lea.sflag [#allocation5], %s374
        %s376 = sand.u32 %s44, 1
        %s377 = smul.addr %s376, 8
        %s378 = scalar_lea.vmem [#allocation4], %s377
        %p379 = pneg %p57
        %p380 = pneg %p54
        %p381 = scmp.lt.s32.totalorder %s36, 1
        %s382 = scalar_select %p381, %s36, 1
        %s383 = smul.addr %s382, 8
        %s384 = scalar_lea.vmem %s2, %s383
        %p385 = pneg %p83
        %p386 = pneg %p80
        %s387 = sand.u32 %s36, 1
        %s388 = scalar_lea.sflag [#allocation8], %s387
        %s389 = sand.u32 %s96, 1
        %s390 = smul.addr %s389, 8
        %s391 = scalar_lea.vmem [#allocation7], %s390
        %p392 = pneg %p109
        %p393 = pneg %p106
        %p394 = pneg %p130
        %p395 = pneg %p127
        %p396 = pneg %p151
        %p397 = pneg %p148
        %p398 = pneg %p172
        %p399 = pneg %p169
        %p400 = pneg %p193
        %p401 = pneg %p190
        %p402 = pneg %p219
        %p403 = pneg %p216
        %s404 = sand.u32 %s206, 1
        %s405 = scalar_lea.sflag [#allocation6], %s404
        %s406 = sand.u32 %s206, 1
        %s407 = smul.addr %s406, 8
        %s408 = scalar_lea.vmem [#allocation15], %s407
        %p409 = scmp.lt.s32.totalorder %s36, 1
        %s410 = scalar_select %p409, %s36, 1
        %s411 = smul.addr %s410, 8
        %s412 = scalar_lea.vmem %s2, %s411
        %s414 = sld [smem:[#allocation3 + %s36]]
        %v415 = vld [vmem:[%s344] sm:$0xff]
        %v416 = vld [vmem:[%s412] sm:$0xff]
        %v417 = vld [vmem:[%s353] sm:$0xff]
        %v418 = vpack.c.bf16 %v415, %v415
        %v419 = vld [vmem:[#allocation9] sm:$0xf]
        %v420 = vld [vmem:[#allocation9 + $0x4] sm:$0xf]
        %v421 = vld [vmem:[#allocation9 + $0x8] sm:$0xf]
        %v422 = vld [vmem:[#allocation9 + $0xc] sm:$0xf]
        %v427 = vunpack.c.l.b16 %v419
        %v428 = vunpack.c.l.b16 %v420
        %v429 = vunpack.c.l.b16 %v421
        %v430 = vunpack.c.l.b16 %v422
        %v431 = vpack.c.b16 %v428, %v427
        %v432 = vpack.c.b16 %v430, %v429
        %vm435 = vcmask 261120
        %v437 = vsel %vm435, %v418, 0
        %439 = vmatprep.subr.bf16.mxu0 0
        %440 = vmatpush1.bf16.msra.mxu0 %v431
        %441 = vmatprep.subr.bf16.mxu0 0
        %442 = vmatpush1.bf16.msra.mxu0 %v432
        %443 = vmatprep.subr.bf16.mxu0 0
        %444 = vmatpush1.bf16.msra.mxu0 0
        %445 = vmatprep.subr.bf16.mxu0 0
        %446 = vmatpush1.bf16.msra.mxu0 0
        %447 = vmatprep.subr.bf16.mxu0 0
        %448 = vmatpush1.bf16.msra.mxu0 0
        %449 = vmatprep.subr.bf16.mxu0 0
        %450 = vmatpush1.bf16.msra.mxu0 0
        %451 = vmatprep.subr.bf16.mxu0 0
        %452 = vmatpush1.bf16.msra.mxu0 0
        %453 = vmatprep.subr.bf16.mxu0 0
        %454 = vmatpush1.bf16.msra.mxu0 0
        %455 = vmatprep.subr.bf16.mxu0 0
        %456 = vmatpush1.bf16.msra.mxu0 0
        %457 = vmatprep.subr.bf16.mxu0 0
        %458 = vmatpush1.bf16.msra.mxu0 0
        %459 = vmatprep.subr.bf16.mxu0 0
        %460 = vmatpush1.bf16.msra.mxu0 0
        %461 = vmatprep.subr.bf16.mxu0 0
        %462 = vmatpush1.bf16.msra.mxu0 0
        %463 = vmatprep.subr.bf16.mxu0 0
        %464 = vmatpush1.bf16.msra.mxu0 0
        %465 = vmatprep.subr.bf16.mxu0 0
        %466 = vmatpush1.bf16.msra.mxu0 0
        %467 = vmatprep.subr.bf16.mxu0 0
        %468 = vmatpush1.bf16.msra.mxu0 0
        %469 = vmatprep.subr.bf16.mxu0 0
        %470 = vmatpush1.bf16.msra.mxu0 0
        %471 = vmatprep.mubr.bf16.mxu0 0
        %472 = vmatmul.mubr.bf16.gmra.mrb[0].mxu0 %v437
        %v473 = vpop.f32.mrb[0].mxu0
        %v474 = vadd.f32 0.0, %v473
        %v475 = vpop.f32.mrb[0].mxu0
        %v476 = vpop.f32.mrb[0].mxu0
        %v477 = vpop.f32.mrb[0].mxu0
        %478 = vdwg.mxu0
        %v479 = vpack.c.bf16 %v416, %v416
        %v480 = vld [vmem:[#allocation10] sm:$0xf]
        %v481 = vld [vmem:[#allocation10 + $0x4] sm:$0xf]
        %v482 = vld [vmem:[#allocation10 + $0x8] sm:$0xf]
        %v483 = vld [vmem:[#allocation10 + $0xc] sm:$0xf]
        %v488 = vunpack.c.l.b16 %v480
        %v489 = vunpack.c.l.b16 %v481
        %v490 = vunpack.c.l.b16 %v482
        %v491 = vunpack.c.l.b16 %v483
        %v492 = vpack.c.b16 %v489, %v488
        %v493 = vpack.c.b16 %v491, %v490
        %v497 = vsel %vm435, %v479, 0
        %499 = vmatprep.subr.bf16.mxu0 0
        %500 = vmatpush1.bf16.msra.mxu0 %v492
        %501 = vmatprep.subr.bf16.mxu0 0
        %502 = vmatpush1.bf16.msra.mxu0 %v493
        %503 = vmatprep.subr.bf16.mxu0 0
        %504 = vmatpush1.bf16.msra.mxu0 0
        %505 = vmatprep.subr.bf16.mxu0 0
        %506 = vmatpush1.bf16.msra.mxu0 0
        %507 = vmatprep.subr.bf16.mxu0 0
        %508 = vmatpush1.bf16.msra.mxu0 0
        %509 = vmatprep.subr.bf16.mxu0 0
        %510 = vmatpush1.bf16.msra.mxu0 0
        %511 = vmatprep.subr.bf16.mxu0 0
        %512 = vmatpush1.bf16.msra.mxu0 0
        %513 = vmatprep.subr.bf16.mxu0 0
        %514 = vmatpush1.bf16.msra.mxu0 0
        %515 = vmatprep.subr.bf16.mxu0 0
        %516 = vmatpush1.bf16.msra.mxu0 0
        %517 = vmatprep.subr.bf16.mxu0 0
        %518 = vmatpush1.bf16.msra.mxu0 0
        %519 = vmatprep.subr.bf16.mxu0 0
        %520 = vmatpush1.bf16.msra.mxu0 0
        %521 = vmatprep.subr.bf16.mxu0 0
        %522 = vmatpush1.bf16.msra.mxu0 0
        %523 = vmatprep.subr.bf16.mxu0 0
        %524 = vmatpush1.bf16.msra.mxu0 0
        %525 = vmatprep.subr.bf16.mxu0 0
        %526 = vmatpush1.bf16.msra.mxu0 0
        %527 = vmatprep.subr.bf16.mxu0 0
        %528 = vmatpush1.bf16.msra.mxu0 0
        %529 = vmatprep.subr.bf16.mxu0 0
        %530 = vmatpush1.bf16.msra.mxu0 0
        %531 = vmatprep.mubr.bf16.mxu0 0
        %532 = vmatmul.mubr.bf16.gmra.mrb[0].mxu0 %v497
        %v533 = vpop.f32.mrb[0].mxu0
        %v534 = vadd.f32 0.0, %v533
        %v535 = vpop.f32.mrb[0].mxu0
        %v536 = vpop.f32.mrb[0].mxu0
        %v537 = vpop.f32.mrb[0].mxu0
        %538 = vdwg.mxu0
        %v539 = vpack.c.bf16 %v417, %v417
        %v540 = vld [vmem:[#allocation12] sm:$0xf]
        %v541 = vld [vmem:[#allocation12 + $0x4] sm:$0xf]
        %v542 = vld [vmem:[#allocation12 + $0x8] sm:$0xf]
        %v543 = vld [vmem:[#allocation12 + $0xc] sm:$0xf]
        %v548 = vunpack.c.l.b16 %v540
        %v549 = vunpack.c.l.b16 %v541
        %v550 = vunpack.c.l.b16 %v542
        %v551 = vunpack.c.l.b16 %v543
        %v552 = vpack.c.b16 %v549, %v548
        %v553 = vpack.c.b16 %v551, %v550
        %v557 = vsel %vm435, %v539, 0
        %559 = vmatprep.subr.bf16.mxu0 0
        %560 = vmatpush1.bf16.msra.mxu0 %v552
        %561 = vmatprep.subr.bf16.mxu0 0
        %562 = vmatpush1.bf16.msra.mxu0 %v553
        %563 = vmatprep.subr.bf16.mxu0 0
        %564 = vmatpush1.bf16.msra.mxu0 0
        %565 = vmatprep.subr.bf16.mxu0 0
        %566 = vmatpush1.bf16.msra.mxu0 0
        %567 = vmatprep.subr.bf16.mxu0 0
        %568 = vmatpush1.bf16.msra.mxu0 0
        %569 = vmatprep.subr.bf16.mxu0 0
        %570 = vmatpush1.bf16.msra.mxu0 0
        %571 = vmatprep.subr.bf16.mxu0 0
        %572 = vmatpush1.bf16.msra.mxu0 0
        %573 = vmatprep.subr.bf16.mxu0 0
        %574 = vmatpush1.bf16.msra.mxu0 0
        %575 = vmatprep.subr.bf16.mxu0 0
        %576 = vmatpush1.bf16.msra.mxu0 0
        %577 = vmatprep.subr.bf16.mxu0 0
        %578 = vmatpush1.bf16.msra.mxu0 0
        %579 = vmatprep.subr.bf16.mxu0 0
        %580 = vmatpush1.bf16.msra.mxu0 0
        %581 = vmatprep.subr.bf16.mxu0 0
        %582 = vmatpush1.bf16.msra.mxu0 0
        %583 = vmatprep.subr.bf16.mxu0 0
        %584 = vmatpush1.bf16.msra.mxu0 0
        %585 = vmatprep.subr.bf16.mxu0 0
        %586 = vmatpush1.bf16.msra.mxu0 0
        %587 = vmatprep.subr.bf16.mxu0 0
        %588 = vmatpush1.bf16.msra.mxu0 0
        %589 = vmatprep.subr.bf16.mxu0 0
        %590 = vmatpush1.bf16.msra.mxu0 0
        %591 = vmatprep.mubr.bf16.mxu0 0
        %592 = vmatmul.mubr.bf16.gmra.mrb[0].mxu0 %v557
        %v593 = vpop.f32.mrb[0].mxu0
        %v594 = vadd.f32 0.0, %v593
        %v595 = vpop.f32.mrb[0].mxu0
        %v596 = vpop.f32.mrb[0].mxu0
        %v597 = vpop.f32.mrb[0].mxu0
        %598 = vdwg.mxu0
        %v599 = vlaneseq
        %v600 = vand.u32 %v599, 127
        %v601 = vstv %s414
        %vm602 = vcmp.lt.s32.totalorder %v600, %v601
        %v603 = vmul.f32 %v474, 0.35355338
        %v604 = vpack.c.bf16 %v603, %v603
        %v605 = vpack.c.bf16 %v534, %v534
        %v606 = vpack.c.bf16 %v594, %v594
        %vm607 = vcmask 64512
        %v609 = vsel %vm607, %v604, 0
        %v612 = vsel %vm607, %v605, 0
        %614 = vmatprep.subr.bf16.mxu0 0
        %615 = vmatpush1.bf16.xpose.msra.mxu0 %v612
        %616 = vmatprep.subr.bf16.mxu0 0
        %617 = vmatpush1.bf16.xpose.msra.mxu0 0
        %618 = vmatprep.subr.bf16.mxu0 0
        %619 = vmatpush1.bf16.xpose.msra.mxu0 0
        %620 = vmatprep.subr.bf16.mxu0 0
        %621 = vmatpush1.bf16.xpose.msra.mxu0 0
        %622 = vmatprep.subr.bf16.mxu0 0
        %623 = vmatpush1.bf16.xpose.msra.mxu0 0
        %624 = vmatprep.subr.bf16.mxu0 0
        %625 = vmatpush1.bf16.xpose.msra.mxu0 0
        %626 = vmatprep.subr.bf16.mxu0 0
        %627 = vmatpush1.bf16.xpose.msra.mxu0 0
        %628 = vmatprep.subr.bf16.mxu0 0
        %629 = vmatpush1.bf16.xpose.msra.mxu0 0
        %630 = vmatprep.subr.bf16.mxu0 0
        %631 = vmatpush1.bf16.xpose.msra.mxu0 0
        %632 = vmatprep.subr.bf16.mxu0 0
        %633 = vmatpush1.bf16.xpose.msra.mxu0 0
        %634 = vmatprep.subr.bf16.mxu0 0
        %635 = vmatpush1.bf16.xpose.msra.mxu0 0
        %636 = vmatprep.subr.bf16.mxu0 0
        %637 = vmatpush1.bf16.xpose.msra.mxu0 0
        %638 = vmatprep.subr.bf16.mxu0 0
        %639 = vmatpush1.bf16.xpose.msra.mxu0 0
        %640 = vmatprep.subr.bf16.mxu0 0
        %641 = vmatpush1.bf16.xpose.msra.mxu0 0
        %642 = vmatprep.subr.bf16.mxu0 0
        %643 = vmatpush1.bf16.xpose.msra.mxu0 0
        %644 = vmatprep.subr.bf16.mxu0 0
        %645 = vmatpush1.bf16.xpose.msra.mxu0 0
        %646 = vmatprep.mubr.bf16.mxu0 0
        %647 = vmatmul.mubr.bf16.gmra.mrb[0].mxu0 %v609
        %v648 = vpop.f32.mrb[0].mxu0
        %v649 = vadd.f32 0.0, %v648
        %v650 = vpop.f32.mrb[0].mxu0
        %v651 = vpop.f32.mrb[0].mxu0
        %v652 = vpop.f32.mrb[0].mxu0
        %653 = vdwg.mxu0
        %v654 = vsel %vm602, %v649, -1000000.0
        %v655 = vsel %vm607, %v654, -inf
        %656 = vmax.xlane.f32.xlu0 %v655
        %v657 = vpop.xlane.xlu0 %656
        %v658 = vsub.f32 %v654, %v657
        %v659 = vmul.f32 %v658, 1.442695
        %v660 = vpow.pop %v659
        %v661 = vsel %vm607, %v660, 0.0
        %662 = vadd.xlane.f32.xlu0 %v661
        %v663 = vpop.xlane.xlu0 %662
        %v664 = vrcp.pop %v663
        %v665 = vmul.f32 %v660, %v664
        %v666 = vpack.c.bf16 %v665, %v665
        %v668 = vsel %vm607, %v666, 0
        %vm670 = vcmask 1043456
        %v672 = vsel %vm670, %v606, 0
        %674 = vmatprep.subr.bf16.mxu0 0
        %675 = vmatpush1.bf16.msra.mxu0 %v672
        %676 = vmatprep.subr.bf16.mxu0 0
        %677 = vmatpush1.bf16.msra.mxu0 0
        %678 = vmatprep.subr.bf16.mxu0 0
        %679 = vmatpush1.bf16.msra.mxu0 0
        %680 = vmatprep.subr.bf16.mxu0 0
        %681 = vmatpush1.bf16.msra.mxu0 0
        %682 = vmatprep.subr.bf16.mxu0 0
        %683 = vmatpush1.bf16.msra.mxu0 0
        %684 = vmatprep.subr.bf16.mxu0 0
        %685 = vmatpush1.bf16.msra.mxu0 0
        %686 = vmatprep.subr.bf16.mxu0 0
        %687 = vmatpush1.bf16.msra.mxu0 0
        %688 = vmatprep.subr.bf16.mxu0 0
        %689 = vmatpush1.bf16.msra.mxu0 0
        %690 = vmatprep.subr.bf16.mxu0 0
        %691 = vmatpush1.bf16.msra.mxu0 0
        %692 = vmatprep.subr.bf16.mxu0 0
        %693 = vmatpush1.bf16.msra.mxu0 0
        %694 = vmatprep.subr.bf16.mxu0 0
        %695 = vmatpush1.bf16.msra.mxu0 0
        %696 = vmatprep.subr.bf16.mxu0 0
        %697 = vmatpush1.bf16.msra.mxu0 0
        %698 = vmatprep.subr.bf16.mxu0 0
        %699 = vmatpush1.bf16.msra.mxu0 0
        %700 = vmatprep.subr.bf16.mxu0 0
        %701 = vmatpush1.bf16.msra.mxu0 0
        %702 = vmatprep.subr.bf16.mxu0 0
        %703 = vmatpush1.bf16.msra.mxu0 0
        %704 = vmatprep.subr.bf16.mxu0 0
        %705 = vmatpush1.bf16.msra.mxu0 0
        %706 = vmatprep.mubr.bf16.mxu0 0
        %707 = vmatmul.mubr.bf16.gmra.mrb[0].mxu0 %v668
        %v708 = vpop.f32.mrb[0].mxu0
        %v709 = vadd.f32 0.0, %v708
        %v710 = vpop.f32.mrb[0].mxu0
        %v711 = vpop.f32.mrb[0].mxu0
        %v712 = vpop.f32.mrb[0].mxu0
        %713 = vdwg.mxu0
        %715 = vrot.lane.b32.xlu0 %v604, 120
        %v716 = vpop.permute.xlu0 %715
        %718 = vrot.lane.b32.xlu0 %v605, 120
        %v719 = vpop.permute.xlu0 %718
        %v721 = vsel %vm607, %v716, 0
        %v724 = vsel %vm607, %v719, 0
        %726 = vmatprep.subr.bf16.mxu0 0
        %727 = vmatpush1.bf16.xpose.msra.mxu0 %v724
        %728 = vmatprep.subr.bf16.mxu0 0
        %729 = vmatpush1.bf16.xpose.msra.mxu0 0
        %730 = vmatprep.subr.bf16.mxu0 0
        %731 = vmatpush1.bf16.xpose.msra.mxu0 0
        %732 = vmatprep.subr.bf16.mxu0 0
        %733 = vmatpush1.bf16.xpose.msra.mxu0 0
        %734 = vmatprep.subr.bf16.mxu0 0
        %735 = vmatpush1.bf16.xpose.msra.mxu0 0
        %736 = vmatprep.subr.bf16.mxu0 0
        %737 = vmatpush1.bf16.xpose.msra.mxu0 0
        %738 = vmatprep.subr.bf16.mxu0 0
        %739 = vmatpush1.bf16.xpose.msra.mxu0 0
        %740 = vmatprep.subr.bf16.mxu0 0
        %741 = vmatpush1.bf16.xpose.msra.mxu0 0
        %742 = vmatprep.subr.bf16.mxu0 0
        %743 = vmatpush1.bf16.xpose.msra.mxu0 0
        %744 = vmatprep.subr.bf16.mxu0 0
        %745 = vmatpush1.bf16.xpose.msra.mxu0 0
        %746 = vmatprep.subr.bf16.mxu0 0
        %747 = vmatpush1.bf16.xpose.msra.mxu0 0
        %748 = vmatprep.subr.bf16.mxu0 0
        %749 = vmatpush1.bf16.xpose.msra.mxu0 0
        %750 = vmatprep.subr.bf16.mxu0 0
        %751 = vmatpush1.bf16.xpose.msra.mxu0 0
        %752 = vmatprep.subr.bf16.mxu0 0
        %753 = vmatpush1.bf16.xpose.msra.mxu0 0
        %754 = vmatprep.subr.bf16.mxu0 0
        %755 = vmatpush1.bf16.xpose.msra.mxu0 0
        %756 = vmatprep.subr.bf16.mxu0 0
        %757 = vmatpush1.bf16.xpose.msra.mxu0 0
        %758 = vmatprep.mubr.bf16.mxu0 0
        %759 = vmatmul.mubr.bf16.gmra.mrb[0].mxu0 %v721
        %v760 = vpop.f32.mrb[0].mxu0
        %v761 = vadd.f32 0.0, %v760
        %v762 = vpop.f32.mrb[0].mxu0
        %v763 = vpop.f32.mrb[0].mxu0
        %v764 = vpop.f32.mrb[0].mxu0
        %765 = vdwg.mxu0
        %v766 = vsel %vm602, %v761, -1000000.0
        %v767 = vsel %vm607, %v766, -inf
        %768 = vmax.xlane.f32.xlu0 %v767
        %v769 = vpop.xlane.xlu0 %768
        %v770 = vsub.f32 %v766, %v769
        %v771 = vmul.f32 %v770, 1.442695
        %v772 = vpow.pop %v771
        %v773 = vsel %vm607, %v772, 0.0
        %774 = vadd.xlane.f32.xlu0 %v773
        %v775 = vpop.xlane.xlu0 %774
        %v776 = vrcp.pop %v775
        %v777 = vmul.f32 %v772, %v776
        %v778 = vpack.c.bf16 %v777, %v777
        %780 = vrot.lane.b32.xlu0 %v606, 120
        %v781 = vpop.permute.xlu0 %780
        %v783 = vsel %vm607, %v778, 0
        %v786 = vsel %vm670, %v781, 0
        %788 = vmatprep.subr.bf16.mxu0 0
        %789 = vmatpush1.bf16.msra.mxu0 %v786
        %790 = vmatprep.subr.bf16.mxu0 0
        %791 = vmatpush1.bf16.msra.mxu0 0
        %792 = vmatprep.subr.bf16.mxu0 0
        %793 = vmatpush1.bf16.msra.mxu0 0
        %794 = vmatprep.subr.bf16.mxu0 0
        %795 = vmatpush1.bf16.msra.mxu0 0
        %796 = vmatprep.subr.bf16.mxu0 0
        %797 = vmatpush1.bf16.msra.mxu0 0
        %798 = vmatprep.subr.bf16.mxu0 0
        %799 = vmatpush1.bf16.msra.mxu0 0
        %800 = vmatprep.subr.bf16.mxu0 0
        %801 = vmatpush1.bf16.msra.mxu0 0
        %802 = vmatprep.subr.bf16.mxu0 0
        %803 = vmatpush1.bf16.msra.mxu0 0
        %804 = vmatprep.subr.bf16.mxu0 0
        %805 = vmatpush1.bf16.msra.mxu0 0
        %806 = vmatprep.subr.bf16.mxu0 0
        %807 = vmatpush1.bf16.msra.mxu0 0
        %808 = vmatprep.subr.bf16.mxu0 0
        %809 = vmatpush1.bf16.msra.mxu0 0
        %810 = vmatprep.subr.bf16.mxu0 0
        %811 = vmatpush1.bf16.msra.mxu0 0
        %812 = vmatprep.subr.bf16.mxu0 0
        %813 = vmatpush1.bf16.msra.mxu0 0
        %814 = vmatprep.subr.bf16.mxu0 0
        %815 = vmatpush1.bf16.msra.mxu0 0
        %816 = vmatprep.subr.bf16.mxu0 0
        %817 = vmatpush1.bf16.msra.mxu0 0
        %818 = vmatprep.subr.bf16.mxu0 0
        %819 = vmatpush1.bf16.msra.mxu0 0
        %820 = vmatprep.mubr.bf16.mxu0 0
        %821 = vmatmul.mubr.bf16.gmra.mrb[0].mxu0 %v783
        %v822 = vpop.f32.mrb[0].mxu0
        %v823 = vadd.f32 0.0, %v822
        %v824 = vpop.f32.mrb[0].mxu0
        %v825 = vpop.f32.mrb[0].mxu0
        %v826 = vpop.f32.mrb[0].mxu0
        %827 = vdwg.mxu0
        %828 = vrot.lane.b32.xlu0 %v604, 112
        %v829 = vpop.permute.xlu0 %828
        %830 = vrot.lane.b32.xlu0 %v605, 112
        %v831 = vpop.permute.xlu0 %830
        %v833 = vsel %vm607, %v829, 0
        %v836 = vsel %vm607, %v831, 0
        %838 = vmatprep.subr.bf16.mxu0 0
        %839 = vmatpush1.bf16.xpose.msra.mxu0 %v836
        %840 = vmatprep.subr.bf16.mxu0 0
        %841 = vmatpush1.bf16.xpose.msra.mxu0 0
        %842 = vmatprep.subr.bf16.mxu0 0
        %843 = vmatpush1.bf16.xpose.msra.mxu0 0
        %844 = vmatprep.subr.bf16.mxu0 0
        %845 = vmatpush1.bf16.xpose.msra.mxu0 0
        %846 = vmatprep.subr.bf16.mxu0 0
        %847 = vmatpush1.bf16.xpose.msra.mxu0 0
        %848 = vmatprep.subr.bf16.mxu0 0
        %849 = vmatpush1.bf16.xpose.msra.mxu0 0
        %850 = vmatprep.subr.bf16.mxu0 0
        %851 = vmatpush1.bf16.xpose.msra.mxu0 0
        %852 = vmatprep.subr.bf16.mxu0 0
        %853 = vmatpush1.bf16.xpose.msra.mxu0 0
        %854 = vmatprep.subr.bf16.mxu0 0
        %855 = vmatpush1.bf16.xpose.msra.mxu0 0
        %856 = vmatprep.subr.bf16.mxu0 0
        %857 = vmatpush1.bf16.xpose.msra.mxu0 0
        %858 = vmatprep.subr.bf16.mxu0 0
        %859 = vmatpush1.bf16.xpose.msra.mxu0 0
        %860 = vmatprep.subr.bf16.mxu0 0
        %861 = vmatpush1.bf16.xpose.msra.mxu0 0
        %862 = vmatprep.subr.bf16.mxu0 0
        %863 = vmatpush1.bf16.xpose.msra.mxu0 0
        %864 = vmatprep.subr.bf16.mxu0 0
        %865 = vmatpush1.bf16.xpose.msra.mxu0 0
        %866 = vmatprep.subr.bf16.mxu0 0
        %867 = vmatpush1.bf16.xpose.msra.mxu0 0
        %868 = vmatprep.subr.bf16.mxu0 0
        %869 = vmatpush1.bf16.xpose.msra.mxu0 0
        %870 = vmatprep.mubr.bf16.mxu0 0
        %871 = vmatmul.mubr.bf16.gmra.mrb[0].mxu0 %v833
        %v872 = vpop.f32.mrb[0].mxu0
        %v873 = vadd.f32 0.0, %v872
        %v874 = vpop.f32.mrb[0].mxu0
        %v875 = vpop.f32.mrb[0].mxu0
        %v876 = vpop.f32.mrb[0].mxu0
        %877 = vdwg.mxu0
        %v878 = vsel %vm602, %v873, -1000000.0
        %v879 = vsel %vm607, %v878, -inf
        %880 = vmax.xlane.f32.xlu0 %v879
        %v881 = vpop.xlane.xlu0 %880
        %v882 = vsub.f32 %v878, %v881
        %v883 = vmul.f32 %v882, 1.442695
        %v884 = vpow.pop %v883
        %v885 = vsel %vm607, %v884, 0.0
        %886 = vadd.xlane.f32.xlu0 %v885
        %v887 = vpop.xlane.xlu0 %886
        %v888 = vrcp.pop %v887
        %v889 = vmul.f32 %v884, %v888
        %v890 = vpack.c.bf16 %v889, %v889
        %891 = vrot.lane.b32.xlu0 %v606, 112
        %v892 = vpop.permute.xlu0 %891
        %v894 = vsel %vm607, %v890, 0
        %v897 = vsel %vm670, %v892, 0
        %899 = vmatprep.subr.bf16.mxu0 0
        %900 = vmatpush1.bf16.msra.mxu0 %v897
        %901 = vmatprep.subr.bf16.mxu0 0
        %902 = vmatpush1.bf16.msra.mxu0 0
        %903 = vmatprep.subr.bf16.mxu0 0
        %904 = vmatpush1.bf16.msra.mxu0 0
        %905 = vmatprep.subr.bf16.mxu0 0
        %906 = vmatpush1.bf16.msra.mxu0 0
        %907 = vmatprep.subr.bf16.mxu0 0
        %908 = vmatpush1.bf16.msra.mxu0 0
        %909 = vmatprep.subr.bf16.mxu0 0
        %910 = vmatpush1.bf16.msra.mxu0 0
        %911 = vmatprep.subr.bf16.mxu0 0
        %912 = vmatpush1.bf16.msra.mxu0 0
        %913 = vmatprep.subr.bf16.mxu0 0
        %914 = vmatpush1.bf16.msra.mxu0 0
        %915 = vmatprep.subr.bf16.mxu0 0
        %916 = vmatpush1.bf16.msra.mxu0 0
        %917 = vmatprep.subr.bf16.mxu0 0
        %918 = vmatpush1.bf16.msra.mxu0 0
        %919 = vmatprep.subr.bf16.mxu0 0
        %920 = vmatpush1.bf16.msra.mxu0 0
        %921 = vmatprep.subr.bf16.mxu0 0
        %922 = vmatpush1.bf16.msra.mxu0 0
        %923 = vmatprep.subr.bf16.mxu0 0
        %924 = vmatpush1.bf16.msra.mxu0 0
        %925 = vmatprep.subr.bf16.mxu0 0
        %926 = vmatpush1.bf16.msra.mxu0 0
        %927 = vmatprep.subr.bf16.mxu0 0
        %928 = vmatpush1.bf16.msra.mxu0 0
        %929 = vmatprep.subr.bf16.mxu0 0
        %930 = vmatpush1.bf16.msra.mxu0 0
        %931 = vmatprep.mubr.bf16.mxu0 0
        %932 = vmatmul.mubr.bf16.gmra.mrb[0].mxu0 %v894
        %v933 = vpop.f32.mrb[0].mxu0
        %v934 = vadd.f32 0.0, %v933
        %v935 = vpop.f32.mrb[0].mxu0
        %v936 = vpop.f32.mrb[0].mxu0
        %v937 = vpop.f32.mrb[0].mxu0
        %938 = vdwg.mxu0
        %939 = vrot.lane.b32.xlu0 %v604, 104
        %v940 = vpop.permute.xlu0 %939
        %941 = vrot.lane.b32.xlu0 %v605, 104
        %v942 = vpop.permute.xlu0 %941
        %v944 = vsel %vm607, %v940, 0
        %v947 = vsel %vm607, %v942, 0
        %949 = vmatprep.subr.bf16.mxu0 0
        %950 = vmatpush1.bf16.xpose.msra.mxu0 %v947
        %951 = vmatprep.subr.bf16.mxu0 0
        %952 = vmatpush1.bf16.xpose.msra.mxu0 0
        %953 = vmatprep.subr.bf16.mxu0 0
        %954 = vmatpush1.bf16.xpose.msra.mxu0 0
        %955 = vmatprep.subr.bf16.mxu0 0
        %956 = vmatpush1.bf16.xpose.msra.mxu0 0
        %957 = vmatprep.subr.bf16.mxu0 0
        %958 = vmatpush1.bf16.xpose.msra.mxu0 0
        %959 = vmatprep.subr.bf16.mxu0 0
        %960 = vmatpush1.bf16.xpose.msra.mxu0 0
        %961 = vmatprep.subr.bf16.mxu0 0
        %962 = vmatpush1.bf16.xpose.msra.mxu0 0
        %963 = vmatprep.subr.bf16.mxu0 0
        %964 = vmatpush1.bf16.xpose.msra.mxu0 0
        %965 = vmatprep.subr.bf16.mxu0 0
        %966 = vmatpush1.bf16.xpose.msra.mxu0 0
        %967 = vmatprep.subr.bf16.mxu0 0
        %968 = vmatpush1.bf16.xpose.msra.mxu0 0
        %969 = vmatprep.subr.bf16.mxu0 0
        %970 = vmatpush1.bf16.xpose.msra.mxu0 0
        %971 = vmatprep.subr.bf16.mxu0 0
        %972 = vmatpush1.bf16.xpose.msra.mxu0 0
        %973 = vmatprep.subr.bf16.mxu0 0
        %974 = vmatpush1.bf16.xpose.msra.mxu0 0
        %975 = vmatprep.subr.bf16.mxu0 0
        %976 = vmatpush1.bf16.xpose.msra.mxu0 0
        %977 = vmatprep.subr.bf16.mxu0 0
        %978 = vmatpush1.bf16.xpose.msra.mxu0 0
        %979 = vmatprep.subr.bf16.mxu0 0
        %980 = vmatpush1.bf16.xpose.msra.mxu0 0
        %981 = vmatprep.mubr.bf16.mxu0 0
        %982 = vmatmul.mubr.bf16.gmra.mrb[0].mxu0 %v944
        %v983 = vpop.f32.mrb[0].mxu0
        %v984 = vadd.f32 0.0, %v983
        %v985 = vpop.f32.mrb[0].mxu0
        %v986 = vpop.f32.mrb[0].mxu0
        %v987 = vpop.f32.mrb[0].mxu0
        %988 = vdwg.mxu0
        %v989 = vsel %vm602, %v984, -1000000.0
        %v990 = vsel %vm607, %v989, -inf
        %991 = vmax.xlane.f32.xlu0 %v990
        %v992 = vpop.xlane.xlu0 %991
        %v993 = vsub.f32 %v989, %v992
        %v994 = vmul.f32 %v993, 1.442695
        %v995 = vpow.pop %v994
        %v996 = vsel %vm607, %v995, 0.0
        %997 = vadd.xlane.f32.xlu0 %v996
        %v998 = vpop.xlane.xlu0 %997
        %v999 = vrcp.pop %v998
        %v1000 = vmul.f32 %v995, %v999
        %v1001 = vpack.c.bf16 %v1000, %v1000
        %1002 = vrot.lane.b32.xlu0 %v606, 104
        %v1003 = vpop.permute.xlu0 %1002
        %v1005 = vsel %vm607, %v1001, 0
        %v1008 = vsel %vm670, %v1003, 0
        %1010 = vmatprep.subr.bf16.mxu0 0
        %1011 = vmatpush1.bf16.msra.mxu0 %v1008
        %1012 = vmatprep.subr.bf16.mxu0 0
        %1013 = vmatpush1.bf16.msra.mxu0 0
        %1014 = vmatprep.subr.bf16.mxu0 0
        %1015 = vmatpush1.bf16.msra.mxu0 0
        %1016 = vmatprep.subr.bf16.mxu0 0
        %1017 = vmatpush1.bf16.msra.mxu0 0
        %1018 = vmatprep.subr.bf16.mxu0 0
        %1019 = vmatpush1.bf16.msra.mxu0 0
        %1020 = vmatprep.subr.bf16.mxu0 0
        %1021 = vmatpush1.bf16.msra.mxu0 0
        %1022 = vmatprep.subr.bf16.mxu0 0
        %1023 = vmatpush1.bf16.msra.mxu0 0
        %1024 = vmatprep.subr.bf16.mxu0 0
        %1025 = vmatpush1.bf16.msra.mxu0 0
        %1026 = vmatprep.subr.bf16.mxu0 0
        %1027 = vmatpush1.bf16.msra.mxu0 0
        %1028 = vmatprep.subr.bf16.mxu0 0
        %1029 = vmatpush1.bf16.msra.mxu0 0
        %1030 = vmatprep.subr.bf16.mxu0 0
        %1031 = vmatpush1.bf16.msra.mxu0 0
        %1032 = vmatprep.subr.bf16.mxu0 0
        %1033 = vmatpush1.bf16.msra.mxu0 0
        %1034 = vmatprep.subr.bf16.mxu0 0
        %1035 = vmatpush1.bf16.msra.mxu0 0
        %1036 = vmatprep.subr.bf16.mxu0 0
        %1037 = vmatpush1.bf16.msra.mxu0 0
        %1038 = vmatprep.subr.bf16.mxu0 0
        %1039 = vmatpush1.bf16.msra.mxu0 0
        %1040 = vmatprep.subr.bf16.mxu0 0
        %1041 = vmatpush1.bf16.msra.mxu0 0
        %1042 = vmatprep.mubr.bf16.mxu0 0
        %1043 = vmatmul.mubr.bf16.gmra.mrb[0].mxu0 %v1005
        %v1044 = vpop.f32.mrb[0].mxu0
        %v1045 = vadd.f32 0.0, %v1044
        %v1046 = vpop.f32.mrb[0].mxu0
        %v1047 = vpop.f32.mrb[0].mxu0
        %v1048 = vpop.f32.mrb[0].mxu0
        %1049 = vdwg.mxu0
        %1051 = vrot.lane.b32.xlu0 %v823, 8
        %v1052 = vpop.permute.xlu0 %1051
        %1055 = vrot.lane.b32.xlu0 %v934, 16
        %v1056 = vpop.permute.xlu0 %1055
        %1059 = vrot.lane.b32.xlu0 %v1045, 24
        %v1060 = vpop.permute.xlu0 %1059
        %v1062 = vsel %vm607, %v709, %v1052
        %vm1063 = vcmask 130048
        %v1064 = vsel %vm1063, %v1062, %v1056
        %vm1065 = vcmask 195584
        %v1066 = vsel %vm1065, %v1064, %v1060
        %v1067 = vpack.c.bf16 %v1066, %v1066
        %v1068 = vld [vmem:[#allocation13] sm:$0xf]
        %v1069 = vld [vmem:[#allocation13 + $0x4] sm:$0xf]
        %v1070 = vld [vmem:[#allocation13 + $0x8] sm:$0xf]
        %v1071 = vld [vmem:[#allocation13 + $0xc] sm:$0xf]
        %v1076 = vunpack.c.l.b16 %v1068
        %v1077 = vunpack.c.l.b16 %v1069
        %v1078 = vunpack.c.l.b16 %v1070
        %v1079 = vunpack.c.l.b16 %v1071
        %v1080 = vpack.c.b16 %v1077, %v1076
        %v1081 = vpack.c.b16 %v1079, %v1078
        %v1085 = vsel %vm435, %v1067, 0
        %1087 = vmatprep.subr.bf16.mxu0 0
        %1088 = vmatpush1.bf16.msra.mxu0 %v1080
        %1089 = vmatprep.subr.bf16.mxu0 0
        %1090 = vmatpush1.bf16.msra.mxu0 %v1081
        %1091 = vmatprep.subr.bf16.mxu0 0
        %1092 = vmatpush1.bf16.msra.mxu0 0
        %1093 = vmatprep.subr.bf16.mxu0 0
        %1094 = vmatpush1.bf16.msra.mxu0 0
        %1095 = vmatprep.subr.bf16.mxu0 0
        %1096 = vmatpush1.bf16.msra.mxu0 0
        %1097 = vmatprep.subr.bf16.mxu0 0
        %1098 = vmatpush1.bf16.msra.mxu0 0
        %1099 = vmatprep.subr.bf16.mxu0 0
        %1100 = vmatpush1.bf16.msra.mxu0 0
        %1101 = vmatprep.subr.bf16.mxu0 0
        %1102 = vmatpush1.bf16.msra.mxu0 0
        %1103 = vmatprep.subr.bf16.mxu0 0
        %1104 = vmatpush1.bf16.msra.mxu0 0
        %1105 = vmatprep.subr.bf16.mxu0 0
        %1106 = vmatpush1.bf16.msra.mxu0 0
        %1107 = vmatprep.subr.bf16.mxu0 0
        %1108 = vmatpush1.bf16.msra.mxu0 0
        %1109 = vmatprep.subr.bf16.mxu0 0
        %1110 = vmatpush1.bf16.msra.mxu0 0
        %1111 = vmatprep.subr.bf16.mxu0 0
        %1112 = vmatpush1.bf16.msra.mxu0 0
        %1113 = vmatprep.subr.bf16.mxu0 0
        %1114 = vmatpush1.bf16.msra.mxu0 0
        %1115 = vmatprep.subr.bf16.mxu0 0
        %1116 = vmatpush1.bf16.msra.mxu0 0
        %1117 = vmatprep.subr.bf16.mxu0 0
        %1118 = vmatpush1.bf16.msra.mxu0 0
        %1119 = vmatprep.mubr.bf16.mxu0 0
        %1120 = vmatmul.mubr.bf16.gmra.mrb[0].mxu0 %v1085
        %v1121 = vpop.f32.mrb[0].mxu0
        %v1122 = vadd.f32 0.0, %v1121
        %v1123 = vpop.f32.mrb[0].mxu0
        %v1124 = vpop.f32.mrb[0].mxu0
        %v1125 = vpop.f32.mrb[0].mxu0
        %1126 = vdwg.mxu0
        %1127 = vst.msk [vmem:[%s408] sm:$0xff] %vm435, %v1122
        %s1128 = sand.u32 %s206, 1
        %s1129 = scalar_lea.sflag [#allocation6], %s1128
        %s1130 = sand.u32 %s206, 1
        %s1131 = smul.addr %s1130, 8
        %s1132 = scalar_lea.vmem [#allocation15], %s1131
        // Predicated region
        $region73: #{multi_head_attention.1} parent=47 // pred_check
          %p1133 = pneg %p216
        $region74: #{multi_head_attention.1} parent=47 // pred_check_branch
          %1135 = sbr.rel (%p1133) target = $region76
        $region75: #{multi_head_attention.1} parent=47 // pred_region
          %s1137 = ssub.s32 128, 128
          %1138 = vsyncadd %s1129, %s1137
          %s1139 = smul.addr %s36, 128
          %s1140 = scalar_lea.hbm %s8, %s1139
          %s1142 = sshll.u32 %s1132, 4
          %s1143 = int_to_ptr.vmem [resolvable:$true] %s1142
          %1145 = dma.vmem_to_hbm [thread:$0]  %s1143, 128, %s1140, %s1129
        $region76: #{multi_head_attention.1} parent=47 // pred_fallthru
          _
      $region48: #{multi_head_attention.1} parent=5 // pred_fallthru
        _
      %p1146 = scmp.le.s32.totalorder 2, %s31
      // Predicated region
      $region77: #{multi_head_attention.1} parent=5 // pred_check
        %p1147 = pneg %p1146
      $region78: #{multi_head_attention.1} parent=5 // pred_check_branch
        %1149 = sbr.rel (%p1147) target = $region80
      $region79: #{multi_head_attention.1} parent=5 // pred_region
        %s1150 = ssub.s32 %s31, 2
        // Predicated region
        $region81: #{multi_head_attention.1} parent=79 // pred_check
          %p1151 = pneg %p222
        $region82: #{multi_head_attention.1} parent=79 // pred_check_branch
          %1153 = sbr.rel (%p1151) target = $region84
        $region83: #{multi_head_attention.1} parent=79 // pred_region
          %s1154 = sand.u32 %s207, 1
          %s1155 = scalar_lea.sflag [#allocation6], %s1154
          %s1156 = sand.u32 %s207, 1
          %s1157 = smul.addr %s1156, 8
          %s1158 = scalar_lea.vmem [#allocation15], %s1157
          %1159 = dma.done %s1155, 128
        $region84: #{multi_head_attention.1} parent=79 // pred_fallthru
          _
      $region80: #{multi_head_attention.1} parent=5 // pred_fallthru
        _
    $region6: #{multi_head_attention.1} parent=1 // loop_footer
      %s35 = sadd.s32 1, %s31
    $region7: #{multi_head_attention.1} parent=1 // loop_footer_branch
      %30 = sbr.rel target = $region3
    $region8: #{multi_head_attention.1} parent=1 // loop_exit
      _
    %1160 = vsyncpa [#allocation5], 1
    %s1161 = scalar_lea.sflag [#allocation5], 1
    %1162 = vsyncpa %s1161, 1
    %1163 = vsyncpa [#allocation8], 1
    %s1164 = scalar_lea.sflag [#allocation8], 1
    %1165 = vsyncpa %s1164, 1
    %1166 = vsyncpa [#allocation11], 1
    %1167 = vsyncpa [#allocation14], 1
    %1168 = vsyncpa [#allocation6], 1
    %s1169 = scalar_lea.sflag [#allocation6], 1
    %1170 = vsyncpa %s1169, 1

</llo_original>
